<compile_context>
chip_gen: v7x
topology: tpu7x:2x2x1
jax: 0.10.0
libtpu: 0.0.40
codegen_flags: <defaults>
</compile_context>

<pallas_src>
import functools

import numpy as np
import jax
import jax.numpy as jnp
from jax import lax
from jax.experimental import pallas as pl
from jax.experimental.pallas import tpu as pltpu


# ---------------------------------------------------------------------------
# Fused kernel
# ---------------------------------------------------------------------------
def _fused_prompt_kernel(x_ref, wgt_ref, bg_ref, p_ref, m_ref, w9_ref,
                         o_ref, summed_ref, interp_ref, taps_ref, *, H, W):
    # x_ref   : [B, Cf, HW]      decoder features (spatial flattened on lanes)
    # wgt_ref : [Cf, N]          weight_generator.weight^T
    # bg_ref  : [1, N]           weight_generator.bias
    # p_ref   : [N, Cp, Hp*Wp]   prompt components
    # m_ref   : [Hp*Wp, HW]      bilinear interpolation matrix (kron(lh, lw)^T)
    # w9_ref  : [Co, 9*Cp]       final_conv weight, taps-major
    # o_ref   : [B, Co, HW]      output prompt
    # scratch : summed [B*Cp, Hp*Wp], interp [B*Cp, HW], taps [9*Cp, B*HW]
    B, Cf, HW = x_ref.shape
    N = wgt_ref.shape[1]
    _, Cp, HpWp = p_ref.shape

    # ---- 1. global average pool + linear + softmax (pure VPU) --------------
    pooled = jnp.mean(x_ref[...].astype(jnp.float32), axis=-1)        # [B, Cf]
    logits = jnp.zeros((B, N), jnp.float32) + bg_ref[...]             # [B, N]
    for c in range(Cf):                                               # Cf outer products
        logits = logits + pooled[:, c:c + 1] * wgt_ref[c:c + 1, :]
    mx = jnp.max(logits, axis=-1, keepdims=True)
    ex = jnp.exp(logits - mx)
    wts = ex / jnp.sum(ex, axis=-1, keepdims=True)                    # [B, N]  (exact div: tiny, keeps 1e-3 parity)

    # ---- 2. weighted sum of prompt components (VPU, ~B*N tiny FMAs) --------
    for b in range(B):
        s_b = jnp.zeros((Cp, HpWp), jnp.float32)
        for n in range(N):
            s_b = s_b + wts[b:b + 1, n:n + 1] * p_ref[n]              # [Cp, HpWp]
        summed_ref[b * Cp:(b + 1) * Cp, :] = s_b

    # ---- 3. bilinear upsample: ONE matmul [B*Cp, HpWp] @ [HpWp, HW] --------
    interp_ref[...] = jnp.dot(summed_ref[...], m_ref[...],
                              preferred_element_type=jnp.float32)     # [B*Cp, HW]

    # ---- 4. build the nine 3x3 taps in-kernel (zero padding) ---------------
    # Tap k = (kh, kw):  tap[c, y*W+x] = interp[c, (y+kh-1)*W + (x+kw-1)]  or 0.
    # Row (dy) bounds are handled by the shifted lane-range store into a zeroed
    # scratch; column (dx) bounds by a per-lane mask on the destination x.
    geom = []
    for k in range(9):
        dy, dx = k // 3 - 1, k % 3 - 1
        d = dy * W + dx
        dst_lo, src_lo, L = max(0, -d), max(0, d), HW - abs(d)
        if dx == 0:
            mask = None
        else:
            xs = (dst_lo + lax.broadcasted_iota(jnp.int32, (Cp, L), 1)) % W
            mask = xs < (W - 1) if dx == 1 else xs >= 1
        geom.append((dst_lo, src_lo, L, mask))

    taps_ref[...] = jnp.zeros_like(taps_ref)                          # boundary lanes stay 0
    for b in range(B):
        for k, (dst_lo, src_lo, L, mask) in enumerate(geom):
            src = interp_ref[b * Cp:(b + 1) * Cp, src_lo:src_lo + L]
            if mask is not None:
                src = jnp.where(mask, src, 0.0)
            taps_ref[k * Cp:(k + 1) * Cp,
                     b * HW + dst_lo:b * HW + dst_lo + L] = src

    # ---- 5. 3x3 conv: ONE matmul [Co, 9*Ci] @ [9*Ci, B*HW] -----------------
    conv = jnp.dot(w9_ref[...], taps_ref[...],
                   preferred_element_type=jnp.float32)                # [Co, B*HW]

    # ---- 6. lane-dense output stores: full [Co, HW] slabs per batch --------
    for b in range(B):
        o_ref[b] = conv[:, b * HW:(b + 1) * HW].astype(o_ref.dtype)


# ---------------------------------------------------------------------------
# Host-side glue (trace-time constants + free reshapes / tiny param transposes)
# ---------------------------------------------------------------------------
def bilinear_matrix(out_size, in_size):
    """Row-coefficient matrix of F.interpolate(mode='bilinear', align_corners=False)."""
    m = np.zeros((out_size, in_size), np.float32)
    if in_size == 1:
        m[:, 0] = 1.0
        return m
    scale = in_size / out_size
    for i in range(out_size):
        src = max((i + 0.5) * scale - 0.5, 0.0)
        i0 = min(int(np.floor(src)), in_size - 1)
        i1 = min(i0 + 1, in_size - 1)
        frac = src - i0
        m[i, i0] += 1.0 - frac
        m[i, i1] += frac
    return m


def prompt_gen_block_v4(x, params):
    B, Cf, H, W = x.shape
    pc = params["prompt_components"]                      # [1, N, Cp, Hp, Wp]
    _, N, Cp, Hp, Wp = pc.shape
    w_conv = params["w_conv"]                             # [Co, Cp, 3, 3]
    Co = w_conv.shape[0]
    HW, HpWp = H * W, Hp * Wp

    # Static (trace-time) bilinear coefficient matrix, folded over both axes.
    m_t = jnp.asarray(np.kron(bilinear_matrix(H, Hp), bilinear_matrix(W, Wp)).T)  # [HpWp, HW]

    # Layout plumbing only.
    x3 = x.reshape(B, Cf, HW)
    wgt = params["w_gen"].T                               # [Cf, N]
    bg = params["b_gen"].reshape(1, N)
    p_ncs = pc[0].reshape(N, Cp, HpWp)                    # [N, Cp, HpWp]
    w9 = jnp.transpose(w_conv, (0, 2, 3, 1)).reshape(Co, 9 * Cp)   # [Co, 9*Ci]

    out = pl.pallas_call(
        functools.partial(_fused_prompt_kernel, H=H, W=W),
        out_shape=jax.ShapeDtypeStruct((B, Co, HW), jnp.float32),
        scratch_shapes=[
            pltpu.VMEM((B * Cp, HpWp), jnp.float32),      # summed prompts
            pltpu.VMEM((B * Cp, HW), jnp.float32),        # upsampled prompts
            pltpu.VMEM((9 * Cp, B * HW), jnp.float32),    # 3x3 conv taps
        ],
    )(x3, wgt, bg, p_ncs, m_t, w9)
    return out.reshape(B, Co, H, W)


# ---------------------------------------------------------------------------
# Pure-JAX reference (mirrors the PyTorch forward)
# ---------------------------------------------------------------------------
def reference_forward(x, params):
    _, _, H, W = x.shape
    _, _, _, Hp, Wp = params["prompt_components"].shape
    lh = jnp.asarray(bilinear_matrix(H, Hp))
    lw = jnp.asarray(bilinear_matrix(W, Wp))
    pooled = x.mean(axis=(2, 3))
    logits = pooled @ params["w_gen"].T + params["b_gen"]
    pw = jax.nn.softmax(logits, axis=1)
    summed = jnp.einsum("bn,nchw->bchw", pw, params["prompt_components"][0])
    interp = jnp.einsum("Hh,Ww,bchw->bcHW", lh, lw, summed)
    return lax.conv_general_dilated(
        interp, params["w_conv"], window_strides=(1, 1), padding="SAME",
        dimension_numbers=("NCHW", "OIHW", "NCHW"))


if __name__ == "__main__":
    # Module config: PromptGenBlockV4(features_input_dim=4, num_prompt_components=5,
    #                                 prompt_channel_dim=8, base_prompt_hw=8)
    B, Cf, H, W = 2, 4, 16, 16
    N = 5            # num_prompt_components
    Cp = 8           # prompt_channel_dim
    Hp = Wp = 8      # base_prompt_hw

    key = jax.random.PRNGKey(0)
    k1, k2, k3, k4, k5 = jax.random.split(key, 5)
    params = {
        "prompt_components": jax.random.normal(k1, (1, N, Cp, Hp, Wp), jnp.float32),
        "w_gen": jax.random.normal(k2, (N, Cf), jnp.float32) / np.sqrt(Cf),
        "b_gen": jax.random.normal(k3, (N,), jnp.float32) * 0.1,
        "w_conv": jax.random.normal(k4, (Cp, Cp, 3, 3), jnp.float32) / np.sqrt(Cp * 9),
    }
    x = jax.random.normal(k5, (B, Cf, H, W), jnp.float32)

    out = jax.jit(prompt_gen_block_v4)(x, params)
    out = jax.block_until_ready(out)
    assert out.shape == (B, Cp, H, W), out.shape

    ref = jax.block_until_ready(reference_forward(x, params))
    assert np.allclose(np.asarray(out), np.asarray(ref), rtol=1e-3, atol=1e-3), (
        "max abs diff: %g" % float(np.max(np.abs(np.asarray(out) - np.asarray(ref)))))

    print("KERNEL_OK")
</pallas_src>

<mosaic_0001>
module attributes {stable_mosaic.version = 11 : i64} {
  func.func @_fused_prompt_kernel(%arg0: memref<2x4x256xf32, #tpu.memory_space<vmem>>, %arg1: memref<4x5xf32, #tpu.memory_space<vmem>>, %arg2: memref<1x5xf32, #tpu.memory_space<vmem>>, %arg3: memref<5x8x64xf32, #tpu.memory_space<vmem>>, %arg4: memref<64x256xf32, #tpu.memory_space<vmem>>, %arg5: memref<8x72xf32, #tpu.memory_space<vmem>>, %arg6: memref<2x8x256xf32, #tpu.memory_space<vmem>>, %arg7: memref<16x64xf32, #tpu.memory_space<vmem>>, %arg8: memref<16x256xf32, #tpu.memory_space<vmem>>, %arg9: memref<72x512xf32, #tpu.memory_space<vmem>>) attributes {dimension_semantics = [], scalar_prefetch = 0 : i64, scratch_operands = 3 : i64, tpu.core_type = #tpu.core_type<tc>} {
    %c0 = arith.constant 0 : index
    %c0_0 = arith.constant 0 : index
    %c0_1 = arith.constant 0 : index
    %0 = vector.load %arg0[%c0, %c0_0, %c0_1] : memref<2x4x256xf32, #tpu.memory_space<vmem>>, vector<2x4x256xf32>
    %cst = arith.constant dense<0.000000e+00> : vector<2x4xf32>
    %1 = vector.multi_reduction <add>, %0, %cst [2] : vector<2x4x256xf32> to vector<2x4xf32>
    %cst_2 = arith.constant 2.560000e+02 : f32
    %2 = vector.broadcast %cst_2 : f32 to vector<2x4xf32>
    %3 = arith.divf %1, %2 : vector<2x4xf32>
    %cst_3 = arith.constant 0.000000e+00 : f32
    %4 = vector.broadcast %cst_3 : f32 to vector<2x5xf32>
    %c0_4 = arith.constant 0 : index
    %c0_5 = arith.constant 0 : index
    %5 = vector.load %arg2[%c0_4, %c0_5] : memref<1x5xf32, #tpu.memory_space<vmem>>, vector<1x5xf32>
    %6 = vector.broadcast %5 : vector<1x5xf32> to vector<2x5xf32>
    %7 = arith.addf %4, %6 : vector<2x5xf32>
    %8 = vector.extract_strided_slice %3 {offsets = [0, 0], sizes = [2, 1], strides = [1, 1]} : vector<2x4xf32> to vector<2x1xf32>
    %c0_6 = arith.constant 0 : index
    %c0_7 = arith.constant 0 : index
    %9 = vector.load %arg1[%c0_6, %c0_7] : memref<4x5xf32, #tpu.memory_space<vmem>>, vector<1x5xf32>
    %10 = vector.broadcast %8 : vector<2x1xf32> to vector<2x5xf32>
    %11 = vector.broadcast %9 : vector<1x5xf32> to vector<2x5xf32>
    %12 = arith.mulf %10, %11 : vector<2x5xf32>
    %13 = arith.addf %7, %12 : vector<2x5xf32>
    %14 = vector.extract_strided_slice %3 {offsets = [0, 1], sizes = [2, 1], strides = [1, 1]} : vector<2x4xf32> to vector<2x1xf32>
    %c1 = arith.constant 1 : index
    %c0_8 = arith.constant 0 : index
    %15 = vector.load %arg1[%c1, %c0_8] : memref<4x5xf32, #tpu.memory_space<vmem>>, vector<1x5xf32>
    %16 = vector.broadcast %14 : vector<2x1xf32> to vector<2x5xf32>
    %17 = vector.broadcast %15 : vector<1x5xf32> to vector<2x5xf32>
    %18 = arith.mulf %16, %17 : vector<2x5xf32>
    %19 = arith.addf %13, %18 : vector<2x5xf32>
    %20 = vector.extract_strided_slice %3 {offsets = [0, 2], sizes = [2, 1], strides = [1, 1]} : vector<2x4xf32> to vector<2x1xf32>
    %c2 = arith.constant 2 : index
    %c0_9 = arith.constant 0 : index
    %21 = vector.load %arg1[%c2, %c0_9] : memref<4x5xf32, #tpu.memory_space<vmem>>, vector<1x5xf32>
    %22 = vector.broadcast %20 : vector<2x1xf32> to vector<2x5xf32>
    %23 = vector.broadcast %21 : vector<1x5xf32> to vector<2x5xf32>
    %24 = arith.mulf %22, %23 : vector<2x5xf32>
    %25 = arith.addf %19, %24 : vector<2x5xf32>
    %26 = vector.extract_strided_slice %3 {offsets = [0, 3], sizes = [2, 1], strides = [1, 1]} : vector<2x4xf32> to vector<2x1xf32>
    %c3 = arith.constant 3 : index
    %c0_10 = arith.constant 0 : index
    %27 = vector.load %arg1[%c3, %c0_10] : memref<4x5xf32, #tpu.memory_space<vmem>>, vector<1x5xf32>
    %28 = vector.broadcast %26 : vector<2x1xf32> to vector<2x5xf32>
    %29 = vector.broadcast %27 : vector<1x5xf32> to vector<2x5xf32>
    %30 = arith.mulf %28, %29 : vector<2x5xf32>
    %31 = arith.addf %25, %30 : vector<2x5xf32>
    %cst_11 = arith.constant dense<0xFF800000> : vector<2xf32>
    %32 = vector.multi_reduction <maximumf>, %31, %cst_11 [1] : vector<2x5xf32> to vector<2xf32>
    %33 = vector.shape_cast %32 : vector<2xf32> to vector<2x1xf32>
    %34 = vector.broadcast %33 : vector<2x1xf32> to vector<2x5xf32>
    %35 = arith.subf %31, %34 : vector<2x5xf32>
    %36 = math.exp %35 : vector<2x5xf32>
    %cst_12 = arith.constant dense<0.000000e+00> : vector<2xf32>
    %37 = vector.multi_reduction <add>, %36, %cst_12 [1] : vector<2x5xf32> to vector<2xf32>
    %38 = vector.shape_cast %37 : vector<2xf32> to vector<2x1xf32>
    %39 = vector.broadcast %38 : vector<2x1xf32> to vector<2x5xf32>
    %40 = arith.divf %36, %39 : vector<2x5xf32>
    %cst_13 = arith.constant 0.000000e+00 : f32
    %41 = vector.broadcast %cst_13 : f32 to vector<8x64xf32>
    %42 = vector.extract_strided_slice %40 {offsets = [0, 0], sizes = [1, 1], strides = [1, 1]} : vector<2x5xf32> to vector<1x1xf32>
    %c0_14 = arith.constant 0 : index
    %c0_15 = arith.constant 0 : index
    %c0_16 = arith.constant 0 : index
    %43 = vector.load %arg3[%c0_14, %c0_15, %c0_16] : memref<5x8x64xf32, #tpu.memory_space<vmem>>, vector<1x8x64xf32>
    %44 = vector.shape_cast %43 : vector<1x8x64xf32> to vector<8x64xf32>
    %45 = vector.broadcast %42 : vector<1x1xf32> to vector<8x64xf32>
    %46 = arith.mulf %45, %44 : vector<8x64xf32>
    %47 = arith.addf %41, %46 : vector<8x64xf32>
    %48 = vector.extract_strided_slice %40 {offsets = [0, 1], sizes = [1, 1], strides = [1, 1]} : vector<2x5xf32> to vector<1x1xf32>
    %c1_17 = arith.constant 1 : index
    %c0_18 = arith.constant 0 : index
    %c0_19 = arith.constant 0 : index
    %49 = vector.load %arg3[%c1_17, %c0_18, %c0_19] : memref<5x8x64xf32, #tpu.memory_space<vmem>>, vector<1x8x64xf32>
    %50 = vector.shape_cast %49 : vector<1x8x64xf32> to vector<8x64xf32>
    %51 = vector.broadcast %48 : vector<1x1xf32> to vector<8x64xf32>
    %52 = arith.mulf %51, %50 : vector<8x64xf32>
    %53 = arith.addf %47, %52 : vector<8x64xf32>
    %54 = vector.extract_strided_slice %40 {offsets = [0, 2], sizes = [1, 1], strides = [1, 1]} : vector<2x5xf32> to vector<1x1xf32>
    %c2_20 = arith.constant 2 : index
    %c0_21 = arith.constant 0 : index
    %c0_22 = arith.constant 0 : index
    %55 = vector.load %arg3[%c2_20, %c0_21, %c0_22] : memref<5x8x64xf32, #tpu.memory_space<vmem>>, vector<1x8x64xf32>
    %56 = vector.shape_cast %55 : vector<1x8x64xf32> to vector<8x64xf32>
    %57 = vector.broadcast %54 : vector<1x1xf32> to vector<8x64xf32>
    %58 = arith.mulf %57, %56 : vector<8x64xf32>
    %59 = arith.addf %53, %58 : vector<8x64xf32>
    %60 = vector.extract_strided_slice %40 {offsets = [0, 3], sizes = [1, 1], strides = [1, 1]} : vector<2x5xf32> to vector<1x1xf32>
    %c3_23 = arith.constant 3 : index
    %c0_24 = arith.constant 0 : index
    %c0_25 = arith.constant 0 : index
    %61 = vector.load %arg3[%c3_23, %c0_24, %c0_25] : memref<5x8x64xf32, #tpu.memory_space<vmem>>, vector<1x8x64xf32>
    %62 = vector.shape_cast %61 : vector<1x8x64xf32> to vector<8x64xf32>
    %63 = vector.broadcast %60 : vector<1x1xf32> to vector<8x64xf32>
    %64 = arith.mulf %63, %62 : vector<8x64xf32>
    %65 = arith.addf %59, %64 : vector<8x64xf32>
    %66 = vector.extract_strided_slice %40 {offsets = [0, 4], sizes = [1, 1], strides = [1, 1]} : vector<2x5xf32> to vector<1x1xf32>
    %c4 = arith.constant 4 : index
    %c0_26 = arith.constant 0 : index
    %c0_27 = arith.constant 0 : index
    %67 = vector.load %arg3[%c4, %c0_26, %c0_27] : memref<5x8x64xf32, #tpu.memory_space<vmem>>, vector<1x8x64xf32>
    %68 = vector.shape_cast %67 : vector<1x8x64xf32> to vector<8x64xf32>
    %69 = vector.broadcast %66 : vector<1x1xf32> to vector<8x64xf32>
    %70 = arith.mulf %69, %68 : vector<8x64xf32>
    %71 = arith.addf %65, %70 : vector<8x64xf32>
    %c0_28 = arith.constant 0 : index
    %c0_29 = arith.constant 0 : index
    %72 = vector.load %arg7[%c0_28, %c0_29] : memref<16x64xf32, #tpu.memory_space<vmem>>, vector<8x64xf32>
    tpu.vector_store %arg7[%c0_28, %c0_29], %71 {strides = array<i32>} : memref<16x64xf32, #tpu.memory_space<vmem>>, vector<8x64xf32>,
    %cst_30 = arith.constant 0.000000e+00 : f32
    %73 = vector.broadcast %cst_30 : f32 to vector<8x64xf32>
    %74 = vector.extract_strided_slice %40 {offsets = [1, 0], sizes = [1, 1], strides = [1, 1]} : vector<2x5xf32> to vector<1x1xf32>
    %c0_31 = arith.constant 0 : index
    %c0_32 = arith.constant 0 : index
    %c0_33 = arith.constant 0 : index
    %75 = vector.load %arg3[%c0_31, %c0_32, %c0_33] : memref<5x8x64xf32, #tpu.memory_space<vmem>>, vector<1x8x64xf32>
    %76 = vector.shape_cast %75 : vector<1x8x64xf32> to vector<8x64xf32>
    %77 = vector.broadcast %74 : vector<1x1xf32> to vector<8x64xf32>
    %78 = arith.mulf %77, %76 : vector<8x64xf32>
    %79 = arith.addf %73, %78 : vector<8x64xf32>
    %80 = vector.extract_strided_slice %40 {offsets = [1, 1], sizes = [1, 1], strides = [1, 1]} : vector<2x5xf32> to vector<1x1xf32>
    %c1_34 = arith.constant 1 : index
    %c0_35 = arith.constant 0 : index
    %c0_36 = arith.constant 0 : index
    %81 = vector.load %arg3[%c1_34, %c0_35, %c0_36] : memref<5x8x64xf32, #tpu.memory_space<vmem>>, vector<1x8x64xf32>
    %82 = vector.shape_cast %81 : vector<1x8x64xf32> to vector<8x64xf32>
    %83 = vector.broadcast %80 : vector<1x1xf32> to vector<8x64xf32>
    %84 = arith.mulf %83, %82 : vector<8x64xf32>
    %85 = arith.addf %79, %84 : vector<8x64xf32>
    %86 = vector.extract_strided_slice %40 {offsets = [1, 2], sizes = [1, 1], strides = [1, 1]} : vector<2x5xf32> to vector<1x1xf32>
    %c2_37 = arith.constant 2 : index
    %c0_38 = arith.constant 0 : index
    %c0_39 = arith.constant 0 : index
    %87 = vector.load %arg3[%c2_37, %c0_38, %c0_39] : memref<5x8x64xf32, #tpu.memory_space<vmem>>, vector<1x8x64xf32>
    %88 = vector.shape_cast %87 : vector<1x8x64xf32> to vector<8x64xf32>
    %89 = vector.broadcast %86 : vector<1x1xf32> to vector<8x64xf32>
    %90 = arith.mulf %89, %88 : vector<8x64xf32>
    %91 = arith.addf %85, %90 : vector<8x64xf32>
    %92 = vector.extract_strided_slice %40 {offsets = [1, 3], sizes = [1, 1], strides = [1, 1]} : vector<2x5xf32> to vector<1x1xf32>
    %c3_40 = arith.constant 3 : index
    %c0_41 = arith.constant 0 : index
    %c0_42 = arith.constant 0 : index
    %93 = vector.load %arg3[%c3_40, %c0_41, %c0_42] : memref<5x8x64xf32, #tpu.memory_space<vmem>>, vector<1x8x64xf32>
    %94 = vector.shape_cast %93 : vector<1x8x64xf32> to vector<8x64xf32>
    %95 = vector.broadcast %92 : vector<1x1xf32> to vector<8x64xf32>
    %96 = arith.mulf %95, %94 : vector<8x64xf32>
    %97 = arith.addf %91, %96 : vector<8x64xf32>
    %98 = vector.extract_strided_slice %40 {offsets = [1, 4], sizes = [1, 1], strides = [1, 1]} : vector<2x5xf32> to vector<1x1xf32>
    %c4_43 = arith.constant 4 : index
    %c0_44 = arith.constant 0 : index
    %c0_45 = arith.constant 0 : index
    %99 = vector.load %arg3[%c4_43, %c0_44, %c0_45] : memref<5x8x64xf32, #tpu.memory_space<vmem>>, vector<1x8x64xf32>
    %100 = vector.shape_cast %99 : vector<1x8x64xf32> to vector<8x64xf32>
    %101 = vector.broadcast %98 : vector<1x1xf32> to vector<8x64xf32>
    %102 = arith.mulf %101, %100 : vector<8x64xf32>
    %103 = arith.addf %97, %102 : vector<8x64xf32>
    %c8 = arith.constant 8 : index
    %c0_46 = arith.constant 0 : index
    %104 = vector.load %arg7[%c8, %c0_46] : memref<16x64xf32, #tpu.memory_space<vmem>>, vector<8x64xf32>
    tpu.vector_store %arg7[%c8, %c0_46], %103 {strides = array<i32>} : memref<16x64xf32, #tpu.memory_space<vmem>>, vector<8x64xf32>,
    %c0_47 = arith.constant 0 : index
    %c0_48 = arith.constant 0 : index
    %105 = vector.load %arg7[%c0_47, %c0_48] : memref<16x64xf32, #tpu.memory_space<vmem>>, vector<16x64xf32>
    %c0_49 = arith.constant 0 : index
    %c0_50 = arith.constant 0 : index
    %106 = vector.load %arg4[%c0_49, %c0_50] : memref<64x256xf32, #tpu.memory_space<vmem>>, vector<64x256xf32>
    %cst_51 = arith.constant dense<0.000000e+00> : vector<16x256xf32>
    %107 = tpu.matmul %105, %106, %cst_51 {dimension_numbers = #tpu.dot_dimension_numbers<[1], [0], [0], [1], [0, 0, 1, 1], [], []>} : vector<16x64xf32>, vector<64x256xf32>, vector<16x256xf32> -> vector<16x256xf32>
    %c0_52 = arith.constant 0 : index
    %c0_53 = arith.constant 0 : index
    %108 = vector.load %arg8[%c0_52, %c0_53] : memref<16x256xf32, #tpu.memory_space<vmem>>, vector<16x256xf32>
    tpu.vector_store %arg8[%c0_52, %c0_53], %107 {strides = array<i32>} : memref<16x256xf32, #tpu.memory_space<vmem>>, vector<16x256xf32>,
    %109 = tpu.iota {dimensions = array<i32: 1>} : vector<8x239xi32>
    %c17_i32 = arith.constant 17 : i32
    %110 = vector.broadcast %c17_i32 : i32 to vector<8x239xi32>
    %111 = arith.addi %110, %109 : vector<8x239xi32>
    %c16_i32 = arith.constant 16 : i32
    %c0_i32 = arith.constant 0 : i32
    %112 = arith.cmpi eq, %c16_i32, %c0_i32 : i32
    %c1_i32 = arith.constant 1 : i32
    %113 = arith.select %112, %c1_i32, %c16_i32 : i32
    %114 = vector.broadcast %113 : i32 to vector<8x239xi32>
    %115 = arith.remsi %111, %114 : vector<8x239xi32>
    %c0_i32_54 = arith.constant 0 : i32
    %116 = vector.broadcast %c0_i32_54 : i32 to vector<8x239xi32>
    %117 = arith.cmpi ne, %115, %116 : vector<8x239xi32>
    %c0_i32_55 = arith.constant 0 : i32
    %118 = vector.broadcast %c0_i32_55 : i32 to vector<8x239xi32>
    %119 = arith.cmpi slt, %115, %118 : vector<8x239xi32>
    %c0_i32_56 = arith.constant 0 : i32
    %120 = arith.cmpi slt, %113, %c0_i32_56 : i32
    %121 = vector.broadcast %120 : i1 to vector<8x239xi1>
    %122 = vector.broadcast %121 : vector<8x239xi1> to vector<8x239xi1>
    %123 = arith.xori %119, %122 : vector<8x239xi1>
    %124 = arith.andi %123, %117 : vector<8x239xi1>
    %125 = vector.broadcast %113 : i32 to vector<8x239xi32>
    %126 = arith.addi %115, %125 : vector<8x239xi32>
    %127 = arith.select %124, %126, %115 : vector<8x239xi1>, vector<8x239xi32>
    %c1_i32_57 = arith.constant 1 : i32
    %128 = vector.broadcast %c1_i32_57 : i32 to vector<8x239xi32>
    %129 = arith.cmpi sge, %127, %128 : vector<8x239xi32>
    %130 = tpu.iota {dimensions = array<i32: 1>} : vector<8x241xi32>
    %c15_i32 = arith.constant 15 : i32
    %131 = vector.broadcast %c15_i32 : i32 to vector<8x241xi32>
    %132 = arith.addi %131, %130 : vector<8x241xi32>
    %c16_i32_58 = arith.constant 16 : i32
    %c0_i32_59 = arith.constant 0 : i32
    %133 = arith.cmpi eq, %c16_i32_58, %c0_i32_59 : i32
    %c1_i32_60 = arith.constant 1 : i32
    %134 = arith.select %133, %c1_i32_60, %c16_i32_58 : i32
    %135 = vector.broadcast %134 : i32 to vector<8x241xi32>
    %136 = arith.remsi %132, %135 : vector<8x241xi32>
    %c0_i32_61 = arith.constant 0 : i32
    %137 = vector.broadcast %c0_i32_61 : i32 to vector<8x241xi32>
    %138 = arith.cmpi ne, %136, %137 : vector<8x241xi32>
    %c0_i32_62 = arith.constant 0 : i32
    %139 = vector.broadcast %c0_i32_62 : i32 to vector<8x241xi32>
    %140 = arith.cmpi slt, %136, %139 : vector<8x241xi32>
    %c0_i32_63 = arith.constant 0 : i32
    %141 = arith.cmpi slt, %134, %c0_i32_63 : i32
    %142 = vector.broadcast %141 : i1 to vector<8x241xi1>
    %143 = vector.broadcast %142 : vector<8x241xi1> to vector<8x241xi1>
    %144 = arith.xori %140, %143 : vector<8x241xi1>
    %145 = arith.andi %144, %138 : vector<8x241xi1>
    %146 = vector.broadcast %134 : i32 to vector<8x241xi32>
    %147 = arith.addi %136, %146 : vector<8x241xi32>
    %148 = arith.select %145, %147, %136 : vector<8x241xi1>, vector<8x241xi32>
    %c15_i32_64 = arith.constant 15 : i32
    %149 = vector.broadcast %c15_i32_64 : i32 to vector<8x241xi32>
    %150 = arith.cmpi slt, %148, %149 : vector<8x241xi32>
    %151 = tpu.iota {dimensions = array<i32: 1>} : vector<8x255xi32>
    %c1_i32_65 = arith.constant 1 : i32
    %152 = vector.broadcast %c1_i32_65 : i32 to vector<8x255xi32>
    %153 = arith.addi %152, %151 : vector<8x255xi32>
    %c16_i32_66 = arith.constant 16 : i32
    %c0_i32_67 = arith.constant 0 : i32
    %154 = arith.cmpi eq, %c16_i32_66, %c0_i32_67 : i32
    %c1_i32_68 = arith.constant 1 : i32
    %155 = arith.select %154, %c1_i32_68, %c16_i32_66 : i32
    %156 = vector.broadcast %155 : i32 to vector<8x255xi32>
    %157 = arith.remsi %153, %156 : vector<8x255xi32>
    %c0_i32_69 = arith.constant 0 : i32
    %158 = vector.broadcast %c0_i32_69 : i32 to vector<8x255xi32>
    %159 = arith.cmpi ne, %157, %158 : vector<8x255xi32>
    %c0_i32_70 = arith.constant 0 : i32
    %160 = vector.broadcast %c0_i32_70 : i32 to vector<8x255xi32>
    %161 = arith.cmpi slt, %157, %160 : vector<8x255xi32>
    %c0_i32_71 = arith.constant 0 : i32
    %162 = arith.cmpi slt, %155, %c0_i32_71 : i32
    %163 = vector.broadcast %162 : i1 to vector<8x255xi1>
    %164 = vector.broadcast %163 : vector<8x255xi1> to vector<8x255xi1>
    %165 = arith.xori %161, %164 : vector<8x255xi1>
    %166 = arith.andi %165, %159 : vector<8x255xi1>
    %167 = vector.broadcast %155 : i32 to vector<8x255xi32>
    %168 = arith.addi %157, %167 : vector<8x255xi32>
    %169 = arith.select %166, %168, %157 : vector<8x255xi1>, vector<8x255xi32>
    %c1_i32_72 = arith.constant 1 : i32
    %170 = vector.broadcast %c1_i32_72 : i32 to vector<8x255xi32>
    %171 = arith.cmpi sge, %169, %170 : vector<8x255xi32>
    %172 = tpu.iota {dimensions = array<i32: 1>} : vector<8x255xi32>
    %c0_i32_73 = arith.constant 0 : i32
    %173 = vector.broadcast %c0_i32_73 : i32 to vector<8x255xi32>
    %174 = arith.addi %173, %172 : vector<8x255xi32>
    %c16_i32_74 = arith.constant 16 : i32
    %c0_i32_75 = arith.constant 0 : i32
    %175 = arith.cmpi eq, %c16_i32_74, %c0_i32_75 : i32
    %c1_i32_76 = arith.constant 1 : i32
    %176 = arith.select %175, %c1_i32_76, %c16_i32_74 : i32
    %177 = vector.broadcast %176 : i32 to vector<8x255xi32>
    %178 = arith.remsi %174, %177 : vector<8x255xi32>
    %c0_i32_77 = arith.constant 0 : i32
    %179 = vector.broadcast %c0_i32_77 : i32 to vector<8x255xi32>
    %180 = arith.cmpi ne, %178, %179 : vector<8x255xi32>
    %c0_i32_78 = arith.constant 0 : i32
    %181 = vector.broadcast %c0_i32_78 : i32 to vector<8x255xi32>
    %182 = arith.cmpi slt, %178, %181 : vector<8x255xi32>
    %c0_i32_79 = arith.constant 0 : i32
    %183 = arith.cmpi slt, %176, %c0_i32_79 : i32
    %184 = vector.broadcast %183 : i1 to vector<8x255xi1>
    %185 = vector.broadcast %184 : vector<8x255xi1> to vector<8x255xi1>
    %186 = arith.xori %182, %185 : vector<8x255xi1>
    %187 = arith.andi %186, %180 : vector<8x255xi1>
    %188 = vector.broadcast %176 : i32 to vector<8x255xi32>
    %189 = arith.addi %178, %188 : vector<8x255xi32>
    %190 = arith.select %187, %189, %178 : vector<8x255xi1>, vector<8x255xi32>
    %c15_i32_80 = arith.constant 15 : i32
    %191 = vector.broadcast %c15_i32_80 : i32 to vector<8x255xi32>
    %192 = arith.cmpi slt, %190, %191 : vector<8x255xi32>
    %193 = tpu.iota {dimensions = array<i32: 1>} : vector<8x241xi32>
    %c0_i32_81 = arith.constant 0 : i32
    %194 = vector.broadcast %c0_i32_81 : i32 to vector<8x241xi32>
    %195 = arith.addi %194, %193 : vector<8x241xi32>
    %c16_i32_82 = arith.constant 16 : i32
    %c0_i32_83 = arith.constant 0 : i32
    %196 = arith.cmpi eq, %c16_i32_82, %c0_i32_83 : i32
    %c1_i32_84 = arith.constant 1 : i32
    %197 = arith.select %196, %c1_i32_84, %c16_i32_82 : i32
    %198 = vector.broadcast %197 : i32 to vector<8x241xi32>
    %199 = arith.remsi %195, %198 : vector<8x241xi32>
    %c0_i32_85 = arith.constant 0 : i32
    %200 = vector.broadcast %c0_i32_85 : i32 to vector<8x241xi32>
    %201 = arith.cmpi ne, %199, %200 : vector<8x241xi32>
    %c0_i32_86 = arith.constant 0 : i32
    %202 = vector.broadcast %c0_i32_86 : i32 to vector<8x241xi32>
    %203 = arith.cmpi slt, %199, %202 : vector<8x241xi32>
    %c0_i32_87 = arith.constant 0 : i32
    %204 = arith.cmpi slt, %197, %c0_i32_87 : i32
    %205 = vector.broadcast %204 : i1 to vector<8x241xi1>
    %206 = vector.broadcast %205 : vector<8x241xi1> to vector<8x241xi1>
    %207 = arith.xori %203, %206 : vector<8x241xi1>
    %208 = arith.andi %207, %201 : vector<8x241xi1>
    %209 = vector.broadcast %197 : i32 to vector<8x241xi32>
    %210 = arith.addi %199, %209 : vector<8x241xi32>
    %211 = arith.select %208, %210, %199 : vector<8x241xi1>, vector<8x241xi32>
    %c1_i32_88 = arith.constant 1 : i32
    %212 = vector.broadcast %c1_i32_88 : i32 to vector<8x241xi32>
    %213 = arith.cmpi sge, %211, %212 : vector<8x241xi32>
    %214 = tpu.iota {dimensions = array<i32: 1>} : vector<8x239xi32>
    %c0_i32_89 = arith.constant 0 : i32
    %215 = vector.broadcast %c0_i32_89 : i32 to vector<8x239xi32>
    %216 = arith.addi %215, %214 : vector<8x239xi32>
    %c16_i32_90 = arith.constant 16 : i32
    %c0_i32_91 = arith.constant 0 : i32
    %217 = arith.cmpi eq, %c16_i32_90, %c0_i32_91 : i32
    %c1_i32_92 = arith.constant 1 : i32
    %218 = arith.select %217, %c1_i32_92, %c16_i32_90 : i32
    %219 = vector.broadcast %218 : i32 to vector<8x239xi32>
    %220 = arith.remsi %216, %219 : vector<8x239xi32>
    %c0_i32_93 = arith.constant 0 : i32
    %221 = vector.broadcast %c0_i32_93 : i32 to vector<8x239xi32>
    %222 = arith.cmpi ne, %220, %221 : vector<8x239xi32>
    %c0_i32_94 = arith.constant 0 : i32
    %223 = vector.broadcast %c0_i32_94 : i32 to vector<8x239xi32>
    %224 = arith.cmpi slt, %220, %223 : vector<8x239xi32>
    %c0_i32_95 = arith.constant 0 : i32
    %225 = arith.cmpi slt, %218, %c0_i32_95 : i32
    %226 = vector.broadcast %225 : i1 to vector<8x239xi1>
    %227 = vector.broadcast %226 : vector<8x239xi1> to vector<8x239xi1>
    %228 = arith.xori %224, %227 : vector<8x239xi1>
    %229 = arith.andi %228, %222 : vector<8x239xi1>
    %230 = vector.broadcast %218 : i32 to vector<8x239xi32>
    %231 = arith.addi %220, %230 : vector<8x239xi32>
    %232 = arith.select %229, %231, %220 : vector<8x239xi1>, vector<8x239xi32>
    %c15_i32_96 = arith.constant 15 : i32
    %233 = vector.broadcast %c15_i32_96 : i32 to vector<8x239xi32>
    %234 = arith.cmpi slt, %232, %233 : vector<8x239xi32>
    %cst_97 = arith.constant 0.000000e+00 : f32
    %235 = vector.broadcast %cst_97 : f32 to vector<72x512xf32>
    %c0_98 = arith.constant 0 : index
    %c0_99 = arith.constant 0 : index
    %236 = vector.load %arg9[%c0_98, %c0_99] : memref<72x512xf32, #tpu.memory_space<vmem>>, vector<72x512xf32>
    tpu.vector_store %arg9[%c0_98, %c0_99], %235 {strides = array<i32>} : memref<72x512xf32, #tpu.memory_space<vmem>>, vector<72x512xf32>,
    %c0_100 = arith.constant 0 : index
    %c0_101 = arith.constant 0 : index
    %237 = vector.load %arg8[%c0_100, %c0_101] : memref<16x256xf32, #tpu.memory_space<vmem>>, vector<8x239xf32>
    %cst_102 = arith.constant 0.000000e+00 : f32
    %238 = vector.broadcast %cst_102 : f32 to vector<8x239xf32>
    %239 = arith.select %129, %237, %238 : vector<8x239xi1>, vector<8x239xf32>
    %c0_103 = arith.constant 0 : index
    %c17 = arith.constant 17 : index
    %240 = vector.load %arg9[%c0_103, %c17] : memref<72x512xf32, #tpu.memory_space<vmem>>, vector<8x239xf32>
    tpu.vector_store %arg9[%c0_103, %c17], %239 {strides = array<i32>} : memref<72x512xf32, #tpu.memory_space<vmem>>, vector<8x239xf32>,
    %c0_104 = arith.constant 0 : index
    %c0_105 = arith.constant 0 : index
    %241 = vector.load %arg8[%c0_104, %c0_105] : memref<16x256xf32, #tpu.memory_space<vmem>>, vector<8x240xf32>
    %c8_106 = arith.constant 8 : index
    %c16 = arith.constant 16 : index
    %242 = vector.load %arg9[%c8_106, %c16] : memref<72x512xf32, #tpu.memory_space<vmem>>, vector<8x240xf32>
    tpu.vector_store %arg9[%c8_106, %c16], %241 {strides = array<i32>} : memref<72x512xf32, #tpu.memory_space<vmem>>, vector<8x240xf32>,
    %c0_107 = arith.constant 0 : index
    %c0_108 = arith.constant 0 : index
    %243 = vector.load %arg8[%c0_107, %c0_108] : memref<16x256xf32, #tpu.memory_space<vmem>>, vector<8x241xf32>
    %cst_109 = arith.constant 0.000000e+00 : f32
    %244 = vector.broadcast %cst_109 : f32 to vector<8x241xf32>
    %245 = arith.select %150, %243, %244 : vector<8x241xi1>, vector<8x241xf32>
    %c16_110 = arith.constant 16 : index
    %c15 = arith.constant 15 : index
    %246 = vector.load %arg9[%c16_110, %c15] : memref<72x512xf32, #tpu.memory_space<vmem>>, vector<8x241xf32>
    tpu.vector_store %arg9[%c16_110, %c15], %245 {strides = array<i32>} : memref<72x512xf32, #tpu.memory_space<vmem>>, vector<8x241xf32>,
    %c0_111 = arith.constant 0 : index
    %c0_112 = arith.constant 0 : index
    %247 = vector.load %arg8[%c0_111, %c0_112] : memref<16x256xf32, #tpu.memory_space<vmem>>, vector<8x255xf32>
    %cst_113 = arith.constant 0.000000e+00 : f32
    %248 = vector.broadcast %cst_113 : f32 to vector<8x255xf32>
    %249 = arith.select %171, %247, %248 : vector<8x255xi1>, vector<8x255xf32>
    %c24 = arith.constant 24 : index
    %c1_114 = arith.constant 1 : index
    %250 = vector.load %arg9[%c24, %c1_114] : memref<72x512xf32, #tpu.memory_space<vmem>>, vector<8x255xf32>
    tpu.vector_store %arg9[%c24, %c1_114], %249 {strides = array<i32>} : memref<72x512xf32, #tpu.memory_space<vmem>>, vector<8x255xf32>,
    %c0_115 = arith.constant 0 : index
    %c0_116 = arith.constant 0 : index
    %251 = vector.load %arg8[%c0_115, %c0_116] : memref<16x256xf32, #tpu.memory_space<vmem>>, vector<8x256xf32>
    %c32 = arith.constant 32 : index
    %c0_117 = arith.constant 0 : index
    %252 = vector.load %arg9[%c32, %c0_117] : memref<72x512xf32, #tpu.memory_space<vmem>>, vector<8x256xf32>
    tpu.vector_store %arg9[%c32, %c0_117], %251 {strides = array<i32>} : memref<72x512xf32, #tpu.memory_space<vmem>>, vector<8x256xf32>,
    %c0_118 = arith.constant 0 : index
    %c1_119 = arith.constant 1 : index
    %253 = vector.load %arg8[%c0_118, %c1_119] : memref<16x256xf32, #tpu.memory_space<vmem>>, vector<8x255xf32>
    %cst_120 = arith.constant 0.000000e+00 : f32
    %254 = vector.broadcast %cst_120 : f32 to vector<8x255xf32>
    %255 = arith.select %192, %253, %254 : vector<8x255xi1>, vector<8x255xf32>
    %c40 = arith.constant 40 : index
    %c0_121 = arith.constant 0 : index
    %256 = vector.load %arg9[%c40, %c0_121] : memref<72x512xf32, #tpu.memory_space<vmem>>, vector<8x255xf32>
    tpu.vector_store %arg9[%c40, %c0_121], %255 {strides = array<i32>} : memref<72x512xf32, #tpu.memory_space<vmem>>, vector<8x255xf32>,
    %c0_122 = arith.constant 0 : index
    %c15_123 = arith.constant 15 : index
    %257 = vector.load %arg8[%c0_122, %c15_123] : memref<16x256xf32, #tpu.memory_space<vmem>>, vector<8x241xf32>
    %cst_124 = arith.constant 0.000000e+00 : f32
    %258 = vector.broadcast %cst_124 : f32 to vector<8x241xf32>
    %259 = arith.select %213, %257, %258 : vector<8x241xi1>, vector<8x241xf32>
    %c48 = arith.constant 48 : index
    %c0_125 = arith.constant 0 : index
    %260 = vector.load %arg9[%c48, %c0_125] : memref<72x512xf32, #tpu.memory_space<vmem>>, vector<8x241xf32>
    tpu.vector_store %arg9[%c48, %c0_125], %259 {strides = array<i32>} : memref<72x512xf32, #tpu.memory_space<vmem>>, vector<8x241xf32>,
    %c0_126 = arith.constant 0 : index
    %c16_127 = arith.constant 16 : index
    %261 = vector.load %arg8[%c0_126, %c16_127] : memref<16x256xf32, #tpu.memory_space<vmem>>, vector<8x240xf32>
    %c56 = arith.constant 56 : index
    %c0_128 = arith.constant 0 : index
    %262 = vector.load %arg9[%c56, %c0_128] : memref<72x512xf32, #tpu.memory_space<vmem>>, vector<8x240xf32>
    tpu.vector_store %arg9[%c56, %c0_128], %261 {strides = array<i32>} : memref<72x512xf32, #tpu.memory_space<vmem>>, vector<8x240xf32>,
    %c0_129 = arith.constant 0 : index
    %c17_130 = arith.constant 17 : index
    %263 = vector.load %arg8[%c0_129, %c17_130] : memref<16x256xf32, #tpu.memory_space<vmem>>, vector<8x239xf32>
    %cst_131 = arith.constant 0.000000e+00 : f32
    %264 = vector.broadcast %cst_131 : f32 to vector<8x239xf32>
    %265 = arith.select %234, %263, %264 : vector<8x239xi1>, vector<8x239xf32>
    %c64 = arith.constant 64 : index
    %c0_132 = arith.constant 0 : index
    %266 = vector.load %arg9[%c64, %c0_132] : memref<72x512xf32, #tpu.memory_space<vmem>>, vector<8x239xf32>
    tpu.vector_store %arg9[%c64, %c0_132], %265 {strides = array<i32>} : memref<72x512xf32, #tpu.memory_space<vmem>>, vector<8x239xf32>,
    %c8_133 = arith.constant 8 : index
    %c0_134 = arith.constant 0 : index
    %267 = vector.load %arg8[%c8_133, %c0_134] : memref<16x256xf32, #tpu.memory_space<vmem>>, vector<8x239xf32>
    %cst_135 = arith.constant 0.000000e+00 : f32
    %268 = vector.broadcast %cst_135 : f32 to vector<8x239xf32>
    %269 = arith.select %129, %267, %268 : vector<8x239xi1>, vector<8x239xf32>
    %c0_136 = arith.constant 0 : index
    %c273 = arith.constant 273 : index
    %270 = vector.load %arg9[%c0_136, %c273] : memref<72x512xf32, #tpu.memory_space<vmem>>, vector<8x239xf32>
    tpu.vector_store %arg9[%c0_136, %c273], %269 {strides = array<i32>} : memref<72x512xf32, #tpu.memory_space<vmem>>, vector<8x239xf32>,
    %c8_137 = arith.constant 8 : index
    %c0_138 = arith.constant 0 : index
    %271 = vector.load %arg8[%c8_137, %c0_138] : memref<16x256xf32, #tpu.memory_space<vmem>>, vector<8x240xf32>
    %c8_139 = arith.constant 8 : index
    %c272 = arith.constant 272 : index
    %272 = vector.load %arg9[%c8_139, %c272] : memref<72x512xf32, #tpu.memory_space<vmem>>, vector<8x240xf32>
    tpu.vector_store %arg9[%c8_139, %c272], %271 {strides = array<i32>} : memref<72x512xf32, #tpu.memory_space<vmem>>, vector<8x240xf32>,
    %c8_140 = arith.constant 8 : index
    %c0_141 = arith.constant 0 : index
    %273 = vector.load %arg8[%c8_140, %c0_141] : memref<16x256xf32, #tpu.memory_space<vmem>>, vector<8x241xf32>
    %cst_142 = arith.constant 0.000000e+00 : f32
    %274 = vector.broadcast %cst_142 : f32 to vector<8x241xf32>
    %275 = arith.select %150, %273, %274 : vector<8x241xi1>, vector<8x241xf32>
    %c16_143 = arith.constant 16 : index
    %c271 = arith.constant 271 : index
    %276 = vector.load %arg9[%c16_143, %c271] : memref<72x512xf32, #tpu.memory_space<vmem>>, vector<8x241xf32>
    tpu.vector_store %arg9[%c16_143, %c271], %275 {strides = array<i32>} : memref<72x512xf32, #tpu.memory_space<vmem>>, vector<8x241xf32>,
    %c8_144 = arith.constant 8 : index
    %c0_145 = arith.constant 0 : index
    %277 = vector.load %arg8[%c8_144, %c0_145] : memref<16x256xf32, #tpu.memory_space<vmem>>, vector<8x255xf32>
    %cst_146 = arith.constant 0.000000e+00 : f32
    %278 = vector.broadcast %cst_146 : f32 to vector<8x255xf32>
    %279 = arith.select %171, %277, %278 : vector<8x255xi1>, vector<8x255xf32>
    %c24_147 = arith.constant 24 : index
    %c257 = arith.constant 257 : index
    %280 = vector.load %arg9[%c24_147, %c257] : memref<72x512xf32, #tpu.memory_space<vmem>>, vector<8x255xf32>
    tpu.vector_store %arg9[%c24_147, %c257], %279 {strides = array<i32>} : memref<72x512xf32, #tpu.memory_space<vmem>>, vector<8x255xf32>,
    %c8_148 = arith.constant 8 : index
    %c0_149 = arith.constant 0 : index
    %281 = vector.load %arg8[%c8_148, %c0_149] : memref<16x256xf32, #tpu.memory_space<vmem>>, vector<8x256xf32>
    %c32_150 = arith.constant 32 : index
    %c256 = arith.constant 256 : index
    %282 = vector.load %arg9[%c32_150, %c256] : memref<72x512xf32, #tpu.memory_space<vmem>>, vector<8x256xf32>
    tpu.vector_store %arg9[%c32_150, %c256], %281 {strides = array<i32>} : memref<72x512xf32, #tpu.memory_space<vmem>>, vector<8x256xf32>,
    %c8_151 = arith.constant 8 : index
    %c1_152 = arith.constant 1 : index
    %283 = vector.load %arg8[%c8_151, %c1_152] : memref<16x256xf32, #tpu.memory_space<vmem>>, vector<8x255xf32>
    %cst_153 = arith.constant 0.000000e+00 : f32
    %284 = vector.broadcast %cst_153 : f32 to vector<8x255xf32>
    %285 = arith.select %192, %283, %284 : vector<8x255xi1>, vector<8x255xf32>
    %c40_154 = arith.constant 40 : index
    %c256_155 = arith.constant 256 : index
    %286 = vector.load %arg9[%c40_154, %c256_155] : memref<72x512xf32, #tpu.memory_space<vmem>>, vector<8x255xf32>
    tpu.vector_store %arg9[%c40_154, %c256_155], %285 {strides = array<i32>} : memref<72x512xf32, #tpu.memory_space<vmem>>, vector<8x255xf32>,
    %c8_156 = arith.constant 8 : index
    %c15_157 = arith.constant 15 : index
    %287 = vector.load %arg8[%c8_156, %c15_157] : memref<16x256xf32, #tpu.memory_space<vmem>>, vector<8x241xf32>
    %cst_158 = arith.constant 0.000000e+00 : f32
    %288 = vector.broadcast %cst_158 : f32 to vector<8x241xf32>
    %289 = arith.select %213, %287, %288 : vector<8x241xi1>, vector<8x241xf32>
    %c48_159 = arith.constant 48 : index
    %c256_160 = arith.constant 256 : index
    %290 = vector.load %arg9[%c48_159, %c256_160] : memref<72x512xf32, #tpu.memory_space<vmem>>, vector<8x241xf32>
    tpu.vector_store %arg9[%c48_159, %c256_160], %289 {strides = array<i32>} : memref<72x512xf32, #tpu.memory_space<vmem>>, vector<8x241xf32>,
    %c8_161 = arith.constant 8 : index
    %c16_162 = arith.constant 16 : index
    %291 = vector.load %arg8[%c8_161, %c16_162] : memref<16x256xf32, #tpu.memory_space<vmem>>, vector<8x240xf32>
    %c56_163 = arith.constant 56 : index
    %c256_164 = arith.constant 256 : index
    %292 = vector.load %arg9[%c56_163, %c256_164] : memref<72x512xf32, #tpu.memory_space<vmem>>, vector<8x240xf32>
    tpu.vector_store %arg9[%c56_163, %c256_164], %291 {strides = array<i32>} : memref<72x512xf32, #tpu.memory_space<vmem>>, vector<8x240xf32>,
    %c8_165 = arith.constant 8 : index
    %c17_166 = arith.constant 17 : index
    %293 = vector.load %arg8[%c8_165, %c17_166] : memref<16x256xf32, #tpu.memory_space<vmem>>, vector<8x239xf32>
    %cst_167 = arith.constant 0.000000e+00 : f32
    %294 = vector.broadcast %cst_167 : f32 to vector<8x239xf32>
    %295 = arith.select %234, %293, %294 : vector<8x239xi1>, vector<8x239xf32>
    %c64_168 = arith.constant 64 : index
    %c256_169 = arith.constant 256 : index
    %296 = vector.load %arg9[%c64_168, %c256_169] : memref<72x512xf32, #tpu.memory_space<vmem>>, vector<8x239xf32>
    tpu.vector_store %arg9[%c64_168, %c256_169], %295 {strides = array<i32>} : memref<72x512xf32, #tpu.memory_space<vmem>>, vector<8x239xf32>,
    %c0_170 = arith.constant 0 : index
    %c0_171 = arith.constant 0 : index
    %297 = vector.load %arg5[%c0_170, %c0_171] : memref<8x72xf32, #tpu.memory_space<vmem>>, vector<8x72xf32>
    %c0_172 = arith.constant 0 : index
    %c0_173 = arith.constant 0 : index
    %298 = vector.load %arg9[%c0_172, %c0_173] : memref<72x512xf32, #tpu.memory_space<vmem>>, vector<72x512xf32>
    %cst_174 = arith.constant dense<0.000000e+00> : vector<8x512xf32>
    %299 = tpu.matmul %297, %298, %cst_174 {dimension_numbers = #tpu.dot_dimension_numbers<[1], [0], [0], [1], [0, 0, 1, 1], [], []>} : vector<8x72xf32>, vector<72x512xf32>, vector<8x512xf32> -> vector<8x512xf32>
    %300 = vector.extract_strided_slice %299 {offsets = [0, 0], sizes = [8, 256], strides = [1, 1]} : vector<8x512xf32> to vector<8x256xf32>
    %c0_175 = arith.constant 0 : index
    %c0_176 = arith.constant 0 : index
    %c0_177 = arith.constant 0 : index
    %301 = vector.load %arg6[%c0_175, %c0_176, %c0_177] : memref<2x8x256xf32, #tpu.memory_space<vmem>>, vector<1x8x256xf32>
    %302 = vector.shape_cast %301 : vector<1x8x256xf32> to vector<8x256xf32>
    %303 = vector.shape_cast %300 : vector<8x256xf32> to vector<1x8x256xf32>
    tpu.vector_store %arg6[%c0_175, %c0_176, %c0_177], %303 {strides = array<i32>} : memref<2x8x256xf32, #tpu.memory_space<vmem>>, vector<1x8x256xf32>,
    %304 = vector.extract_strided_slice %299 {offsets = [0, 256], sizes = [8, 256], strides = [1, 1]} : vector<8x512xf32> to vector<8x256xf32>
    %c1_178 = arith.constant 1 : index
    %c0_179 = arith.constant 0 : index
    %c0_180 = arith.constant 0 : index
    %305 = vector.load %arg6[%c1_178, %c0_179, %c0_180] : memref<2x8x256xf32, #tpu.memory_space<vmem>>, vector<1x8x256xf32>
    %306 = vector.shape_cast %305 : vector<1x8x256xf32> to vector<8x256xf32>
    %307 = vector.shape_cast %304 : vector<8x256xf32> to vector<1x8x256xf32>
    tpu.vector_store %arg6[%c1_178, %c0_179, %c0_180], %307 {strides = array<i32>} : memref<2x8x256xf32, #tpu.memory_space<vmem>>, vector<1x8x256xf32>,
    return
  }
}

</mosaic_0001>

<llo_original>
// kernel: squeeze.1
$region0: #{squeeze.1}
  %s0 = inlined_call_operand.hbm [shape: f32[1,5,8,8,8], index: 0, kind: input, shape index: {}]
  %s1 = inlined_call_operand.vmem [shape: f32[5,8,64], index: 1, kind: output, shape index: {}]
  $region1: #{squeeze.1} parent=0
    #allocation0 [shape = 'u8[163840]{0}', space=vmem, size = 0x28000, scoped, tag = 'operand span for operand 0']
    #allocation1 [shape = 's32[1]{0}', space=sflag, size = 0x4, scoped, tag = 'scoped memory for squeeze.1']
    %2 = vsyncpa [#allocation1], 0
    %s4 = ssub.s32 5120, 5120
    %5 = vsyncadd [#allocation1], %s4
    %s7 = sshll.u32 [#allocation0], 4
    %s8 = int_to_ptr.vmem [resolvable:$true] %s7
    %10 = dma.hbm_to_vmem [thread:$0]  %s0, 5120, %s8, [#allocation1]
    %11 = dma.done [#allocation1], 5120
    %v12 = vld [vmem:[#allocation0] ss:$8 sm:$0xf]
    %v13 = vld [vmem:[#allocation0] ss:$8 sm:$0xf0]
    %vm14 = vcmask 1047556
    %v15 = vsel %vm14, %v13, %v12
    %vm16 = vcmask 64512
    %17 = vst.msk [vmem:[%s1] sm:$0xff] %vm16, %v15
    %s18 = scalar_lea.vmem [#allocation0], 64
    %v19 = vld [vmem:[%s18] ss:$8 sm:$0xf]
    %s20 = scalar_lea.vmem [#allocation0], 64
    %v21 = vld [vmem:[%s20] ss:$8 sm:$0xf0]
    %vm22 = vcmask 1047556
    %v23 = vsel %vm22, %v21, %v19
    %vm24 = vcmask 64512
    %s25 = scalar_lea.vmem %s1, 8
    %26 = vst.msk [vmem:[%s25] sm:$0xff] %vm24, %v23
    %s27 = scalar_lea.vmem [#allocation0], 128
    %v28 = vld [vmem:[%s27] ss:$8 sm:$0xf]
    %s29 = scalar_lea.vmem [#allocation0], 128
    %v30 = vld [vmem:[%s29] ss:$8 sm:$0xf0]
    %vm31 = vcmask 1047556
    %v32 = vsel %vm31, %v30, %v28
    %vm33 = vcmask 64512
    %s34 = scalar_lea.vmem %s1, 16
    %35 = vst.msk [vmem:[%s34] sm:$0xff] %vm33, %v32
    %s36 = scalar_lea.vmem [#allocation0], 192
    %v37 = vld [vmem:[%s36] ss:$8 sm:$0xf]
    %s38 = scalar_lea.vmem [#allocation0], 192
    %v39 = vld [vmem:[%s38] ss:$8 sm:$0xf0]
    %vm40 = vcmask 1047556
    %v41 = vsel %vm40, %v39, %v37
    %vm42 = vcmask 64512
    %s43 = scalar_lea.vmem %s1, 24
    %44 = vst.msk [vmem:[%s43] sm:$0xff] %vm42, %v41
    %s45 = scalar_lea.vmem [#allocation0], 256
    %v46 = vld [vmem:[%s45] ss:$8 sm:$0xf]
    %s47 = scalar_lea.vmem [#allocation0], 256
    %v48 = vld [vmem:[%s47] ss:$8 sm:$0xf0]
    %vm49 = vcmask 1047556
    %v50 = vsel %vm49, %v48, %v46
    %vm51 = vcmask 64512
    %s52 = scalar_lea.vmem %s1, 32
    %53 = vst.msk [vmem:[%s52] sm:$0xff] %vm51, %v50
    %s54 = scalar_lea.vmem [#allocation0], 7
    %v55 = vld [vmem:[%s54] ss:$8 sm:$0xf]
    %s56 = scalar_lea.vmem [#allocation0], 7
    %v57 = vld [vmem:[%s56] ss:$8 sm:$0xf0]
    %vm58 = vcmask 1047556
    %v59 = vsel %vm58, %v57, %v55
    %60 = vrot.lane.b32.xlu0 %v59, 56
    %v61 = vpop.permute.xlu0 %60
    %vm62 = vcmask 523712
    %63 = vst.msk [vmem:[%s1] sm:$0xff] %vm62, %v61
    %s64 = scalar_lea.vmem [#allocation0], 263
    %v65 = vld [vmem:[%s64] ss:$8 sm:$0xf]
    %s66 = scalar_lea.vmem [#allocation0], 263
    %v67 = vld [vmem:[%s66] ss:$8 sm:$0xf0]
    %vm68 = vcmask 1047556
    %v69 = vsel %vm68, %v67, %v65
    %70 = vrot.lane.b32.xlu0 %v69, 56
    %v71 = vpop.permute.xlu0 %70
    %vm72 = vcmask 523712
    %s73 = scalar_lea.vmem %s1, 32
    %74 = vst.msk [vmem:[%s73] sm:$0xff] %vm72, %v71
    %s75 = scalar_lea.vmem [#allocation0], 71
    %v76 = vld [vmem:[%s75] ss:$8 sm:$0xf]
    %s77 = scalar_lea.vmem [#allocation0], 71
    %v78 = vld [vmem:[%s77] ss:$8 sm:$0xf0]
    %vm79 = vcmask 1047556
    %v80 = vsel %vm79, %v78, %v76
    %81 = vrot.lane.b32.xlu0 %v80, 56
    %v82 = vpop.permute.xlu0 %81
    %vm83 = vcmask 523712
    %s84 = scalar_lea.vmem %s1, 8
    %85 = vst.msk [vmem:[%s84] sm:$0xff] %vm83, %v82
    %s86 = scalar_lea.vmem [#allocation0], 135
    %v87 = vld [vmem:[%s86] ss:$8 sm:$0xf]
    %s88 = scalar_lea.vmem [#allocation0], 135
    %v89 = vld [vmem:[%s88] ss:$8 sm:$0xf0]
    %vm90 = vcmask 1047556
    %v91 = vsel %vm90, %v89, %v87
    %92 = vrot.lane.b32.xlu0 %v91, 56
    %v93 = vpop.permute.xlu0 %92
    %vm94 = vcmask 523712
    %s95 = scalar_lea.vmem %s1, 16
    %96 = vst.msk [vmem:[%s95] sm:$0xff] %vm94, %v93
    %s97 = scalar_lea.vmem [#allocation0], 199
    %v98 = vld [vmem:[%s97] ss:$8 sm:$0xf]
    %s99 = scalar_lea.vmem [#allocation0], 199
    %v100 = vld [vmem:[%s99] ss:$8 sm:$0xf0]
    %vm101 = vcmask 1047556
    %v102 = vsel %vm101, %v100, %v98
    %103 = vrot.lane.b32.xlu0 %v102, 56
    %v104 = vpop.permute.xlu0 %103
    %vm105 = vcmask 523712
    %s106 = scalar_lea.vmem %s1, 24
    %107 = vst.msk [vmem:[%s106] sm:$0xff] %vm105, %v104
    %s108 = scalar_lea.vmem [#allocation0], 6
    %v109 = vld [vmem:[%s108] ss:$8 sm:$0xf]
    %s110 = scalar_lea.vmem [#allocation0], 6
    %v111 = vld [vmem:[%s110] ss:$8 sm:$0xf0]
    %vm112 = vcmask 1047556
    %v113 = vsel %vm112, %v111, %v109
    %114 = vrot.lane.b32.xlu0 %v113, 48
    %v115 = vpop.permute.xlu0 %114
    %vm116 = vcmask 458112
    %117 = vst.msk [vmem:[%s1] sm:$0xff] %vm116, %v115
    %s118 = scalar_lea.vmem [#allocation0], 262
    %v119 = vld [vmem:[%s118] ss:$8 sm:$0xf]
    %s120 = scalar_lea.vmem [#allocation0], 262
    %v121 = vld [vmem:[%s120] ss:$8 sm:$0xf0]
    %vm122 = vcmask 1047556
    %v123 = vsel %vm122, %v121, %v119
    %124 = vrot.lane.b32.xlu0 %v123, 48
    %v125 = vpop.permute.xlu0 %124
    %vm126 = vcmask 458112
    %s127 = scalar_lea.vmem %s1, 32
    %128 = vst.msk [vmem:[%s127] sm:$0xff] %vm126, %v125
    %s129 = scalar_lea.vmem [#allocation0], 70
    %v130 = vld [vmem:[%s129] ss:$8 sm:$0xf]
    %s131 = scalar_lea.vmem [#allocation0], 70
    %v132 = vld [vmem:[%s131] ss:$8 sm:$0xf0]
    %vm133 = vcmask 1047556
    %v134 = vsel %vm133, %v132, %v130
    %135 = vrot.lane.b32.xlu0 %v134, 48
    %v136 = vpop.permute.xlu0 %135
    %vm137 = vcmask 458112
    %s138 = scalar_lea.vmem %s1, 8
    %139 = vst.msk [vmem:[%s138] sm:$0xff] %vm137, %v136
    %s140 = scalar_lea.vmem [#allocation0], 134
    %v141 = vld [vmem:[%s140] ss:$8 sm:$0xf]
    %s142 = scalar_lea.vmem [#allocation0], 134
    %v143 = vld [vmem:[%s142] ss:$8 sm:$0xf0]
    %vm144 = vcmask 1047556
    %v145 = vsel %vm144, %v143, %v141
    %146 = vrot.lane.b32.xlu0 %v145, 48
    %v147 = vpop.permute.xlu0 %146
    %vm148 = vcmask 458112
    %s149 = scalar_lea.vmem %s1, 16
    %150 = vst.msk [vmem:[%s149] sm:$0xff] %vm148, %v147
    %s151 = scalar_lea.vmem [#allocation0], 198
    %v152 = vld [vmem:[%s151] ss:$8 sm:$0xf]
    %s153 = scalar_lea.vmem [#allocation0], 198
    %v154 = vld [vmem:[%s153] ss:$8 sm:$0xf0]
    %vm155 = vcmask 1047556
    %v156 = vsel %vm155, %v154, %v152
    %157 = vrot.lane.b32.xlu0 %v156, 48
    %v158 = vpop.permute.xlu0 %157
    %vm159 = vcmask 458112
    %s160 = scalar_lea.vmem %s1, 24
    %161 = vst.msk [vmem:[%s160] sm:$0xff] %vm159, %v158
    %s162 = scalar_lea.vmem [#allocation0], 5
    %v163 = vld [vmem:[%s162] ss:$8 sm:$0xf]
    %s164 = scalar_lea.vmem [#allocation0], 5
    %v165 = vld [vmem:[%s164] ss:$8 sm:$0xf0]
    %vm166 = vcmask 1047556
    %v167 = vsel %vm166, %v165, %v163
    %168 = vrot.lane.b32.xlu0 %v167, 40
    %v169 = vpop.permute.xlu0 %168
    %vm170 = vcmask 392512
    %171 = vst.msk [vmem:[%s1] sm:$0xff] %vm170, %v169
    %s172 = scalar_lea.vmem [#allocation0], 261
    %v173 = vld [vmem:[%s172] ss:$8 sm:$0xf]
    %s174 = scalar_lea.vmem [#allocation0], 261
    %v175 = vld [vmem:[%s174] ss:$8 sm:$0xf0]
    %vm176 = vcmask 1047556
    %v177 = vsel %vm176, %v175, %v173
    %178 = vrot.lane.b32.xlu0 %v177, 40
    %v179 = vpop.permute.xlu0 %178
    %vm180 = vcmask 392512
    %s181 = scalar_lea.vmem %s1, 32
    %182 = vst.msk [vmem:[%s181] sm:$0xff] %vm180, %v179
    %s183 = scalar_lea.vmem [#allocation0], 69
    %v184 = vld [vmem:[%s183] ss:$8 sm:$0xf]
    %s185 = scalar_lea.vmem [#allocation0], 69
    %v186 = vld [vmem:[%s185] ss:$8 sm:$0xf0]
    %vm187 = vcmask 1047556
    %v188 = vsel %vm187, %v186, %v184
    %189 = vrot.lane.b32.xlu0 %v188, 40
    %v190 = vpop.permute.xlu0 %189
    %vm191 = vcmask 392512
    %s192 = scalar_lea.vmem %s1, 8
    %193 = vst.msk [vmem:[%s192] sm:$0xff] %vm191, %v190
    %s194 = scalar_lea.vmem [#allocation0], 133
    %v195 = vld [vmem:[%s194] ss:$8 sm:$0xf]
    %s196 = scalar_lea.vmem [#allocation0], 133
    %v197 = vld [vmem:[%s196] ss:$8 sm:$0xf0]
    %vm198 = vcmask 1047556
    %v199 = vsel %vm198, %v197, %v195
    %200 = vrot.lane.b32.xlu0 %v199, 40
    %v201 = vpop.permute.xlu0 %200
    %vm202 = vcmask 392512
    %s203 = scalar_lea.vmem %s1, 16
    %204 = vst.msk [vmem:[%s203] sm:$0xff] %vm202, %v201
    %s205 = scalar_lea.vmem [#allocation0], 197
    %v206 = vld [vmem:[%s205] ss:$8 sm:$0xf]
    %s207 = scalar_lea.vmem [#allocation0], 197
    %v208 = vld [vmem:[%s207] ss:$8 sm:$0xf0]
    %vm209 = vcmask 1047556
    %v210 = vsel %vm209, %v208, %v206
    %211 = vrot.lane.b32.xlu0 %v210, 40
    %v212 = vpop.permute.xlu0 %211
    %vm213 = vcmask 392512
    %s214 = scalar_lea.vmem %s1, 24
    %215 = vst.msk [vmem:[%s214] sm:$0xff] %vm213, %v212
    %s216 = scalar_lea.vmem [#allocation0], 4
    %v217 = vld [vmem:[%s216] ss:$8 sm:$0xf]
    %s218 = scalar_lea.vmem [#allocation0], 4
    %v219 = vld [vmem:[%s218] ss:$8 sm:$0xf0]
    %vm220 = vcmask 1047556
    %v221 = vsel %vm220, %v219, %v217
    %222 = vrot.lane.b32.xlu0 %v221, 32
    %v223 = vpop.permute.xlu0 %222
    %vm224 = vcmask 326912
    %225 = vst.msk [vmem:[%s1] sm:$0xff] %vm224, %v223
    %s226 = scalar_lea.vmem [#allocation0], 260
    %v227 = vld [vmem:[%s226] ss:$8 sm:$0xf]
    %s228 = scalar_lea.vmem [#allocation0], 260
    %v229 = vld [vmem:[%s228] ss:$8 sm:$0xf0]
    %vm230 = vcmask 1047556
    %v231 = vsel %vm230, %v229, %v227
    %232 = vrot.lane.b32.xlu0 %v231, 32
    %v233 = vpop.permute.xlu0 %232
    %vm234 = vcmask 326912
    %s235 = scalar_lea.vmem %s1, 32
    %236 = vst.msk [vmem:[%s235] sm:$0xff] %vm234, %v233
    %s237 = scalar_lea.vmem [#allocation0], 68
    %v238 = vld [vmem:[%s237] ss:$8 sm:$0xf]
    %s239 = scalar_lea.vmem [#allocation0], 68
    %v240 = vld [vmem:[%s239] ss:$8 sm:$0xf0]
    %vm241 = vcmask 1047556
    %v242 = vsel %vm241, %v240, %v238
    %243 = vrot.lane.b32.xlu0 %v242, 32
    %v244 = vpop.permute.xlu0 %243
    %vm245 = vcmask 326912
    %s246 = scalar_lea.vmem %s1, 8
    %247 = vst.msk [vmem:[%s246] sm:$0xff] %vm245, %v244
    %s248 = scalar_lea.vmem [#allocation0], 132
    %v249 = vld [vmem:[%s248] ss:$8 sm:$0xf]
    %s250 = scalar_lea.vmem [#allocation0], 132
    %v251 = vld [vmem:[%s250] ss:$8 sm:$0xf0]
    %vm252 = vcmask 1047556
    %v253 = vsel %vm252, %v251, %v249
    %254 = vrot.lane.b32.xlu0 %v253, 32
    %v255 = vpop.permute.xlu0 %254
    %vm256 = vcmask 326912
    %s257 = scalar_lea.vmem %s1, 16
    %258 = vst.msk [vmem:[%s257] sm:$0xff] %vm256, %v255
    %s259 = scalar_lea.vmem [#allocation0], 196
    %v260 = vld [vmem:[%s259] ss:$8 sm:$0xf]
    %s261 = scalar_lea.vmem [#allocation0], 196
    %v262 = vld [vmem:[%s261] ss:$8 sm:$0xf0]
    %vm263 = vcmask 1047556
    %v264 = vsel %vm263, %v262, %v260
    %265 = vrot.lane.b32.xlu0 %v264, 32
    %v266 = vpop.permute.xlu0 %265
    %vm267 = vcmask 326912
    %s268 = scalar_lea.vmem %s1, 24
    %269 = vst.msk [vmem:[%s268] sm:$0xff] %vm267, %v266
    %s270 = scalar_lea.vmem [#allocation0], 3
    %v271 = vld [vmem:[%s270] ss:$8 sm:$0xf]
    %s272 = scalar_lea.vmem [#allocation0], 3
    %v273 = vld [vmem:[%s272] ss:$8 sm:$0xf0]
    %vm274 = vcmask 1047556
    %v275 = vsel %vm274, %v273, %v271
    %276 = vrot.lane.b32.xlu0 %v275, 24
    %v277 = vpop.permute.xlu0 %276
    %vm278 = vcmask 261312
    %279 = vst.msk [vmem:[%s1] sm:$0xff] %vm278, %v277
    %s280 = scalar_lea.vmem [#allocation0], 259
    %v281 = vld [vmem:[%s280] ss:$8 sm:$0xf]
    %s282 = scalar_lea.vmem [#allocation0], 259
    %v283 = vld [vmem:[%s282] ss:$8 sm:$0xf0]
    %vm284 = vcmask 1047556
    %v285 = vsel %vm284, %v283, %v281
    %286 = vrot.lane.b32.xlu0 %v285, 24
    %v287 = vpop.permute.xlu0 %286
    %vm288 = vcmask 261312
    %s289 = scalar_lea.vmem %s1, 32
    %290 = vst.msk [vmem:[%s289] sm:$0xff] %vm288, %v287
    %s291 = scalar_lea.vmem [#allocation0], 67
    %v292 = vld [vmem:[%s291] ss:$8 sm:$0xf]
    %s293 = scalar_lea.vmem [#allocation0], 67
    %v294 = vld [vmem:[%s293] ss:$8 sm:$0xf0]
    %vm295 = vcmask 1047556
    %v296 = vsel %vm295, %v294, %v292
    %297 = vrot.lane.b32.xlu0 %v296, 24
    %v298 = vpop.permute.xlu0 %297
    %vm299 = vcmask 261312
    %s300 = scalar_lea.vmem %s1, 8
    %301 = vst.msk [vmem:[%s300] sm:$0xff] %vm299, %v298
    %s302 = scalar_lea.vmem [#allocation0], 131
    %v303 = vld [vmem:[%s302] ss:$8 sm:$0xf]
    %s304 = scalar_lea.vmem [#allocation0], 131
    %v305 = vld [vmem:[%s304] ss:$8 sm:$0xf0]
    %vm306 = vcmask 1047556
    %v307 = vsel %vm306, %v305, %v303
    %308 = vrot.lane.b32.xlu0 %v307, 24
    %v309 = vpop.permute.xlu0 %308
    %vm310 = vcmask 261312
    %s311 = scalar_lea.vmem %s1, 16
    %312 = vst.msk [vmem:[%s311] sm:$0xff] %vm310, %v309
    %s313 = scalar_lea.vmem [#allocation0], 195
    %v314 = vld [vmem:[%s313] ss:$8 sm:$0xf]
    %s315 = scalar_lea.vmem [#allocation0], 195
    %v316 = vld [vmem:[%s315] ss:$8 sm:$0xf0]
    %vm317 = vcmask 1047556
    %v318 = vsel %vm317, %v316, %v314
    %319 = vrot.lane.b32.xlu0 %v318, 24
    %v320 = vpop.permute.xlu0 %319
    %vm321 = vcmask 261312
    %s322 = scalar_lea.vmem %s1, 24
    %323 = vst.msk [vmem:[%s322] sm:$0xff] %vm321, %v320
    %s324 = scalar_lea.vmem [#allocation0], 2
    %v325 = vld [vmem:[%s324] ss:$8 sm:$0xf]
    %s326 = scalar_lea.vmem [#allocation0], 2
    %v327 = vld [vmem:[%s326] ss:$8 sm:$0xf0]
    %vm328 = vcmask 1047556
    %v329 = vsel %vm328, %v327, %v325
    %330 = vrot.lane.b32.xlu0 %v329, 16
    %v331 = vpop.permute.xlu0 %330
    %vm332 = vcmask 195712
    %333 = vst.msk [vmem:[%s1] sm:$0xff] %vm332, %v331
    %s334 = scalar_lea.vmem [#allocation0], 258
    %v335 = vld [vmem:[%s334] ss:$8 sm:$0xf]
    %s336 = scalar_lea.vmem [#allocation0], 258
    %v337 = vld [vmem:[%s336] ss:$8 sm:$0xf0]
    %vm338 = vcmask 1047556
    %v339 = vsel %vm338, %v337, %v335
    %340 = vrot.lane.b32.xlu0 %v339, 16
    %v341 = vpop.permute.xlu0 %340
    %vm342 = vcmask 195712
    %s343 = scalar_lea.vmem %s1, 32
    %344 = vst.msk [vmem:[%s343] sm:$0xff] %vm342, %v341
    %s345 = scalar_lea.vmem [#allocation0], 66
    %v346 = vld [vmem:[%s345] ss:$8 sm:$0xf]
    %s347 = scalar_lea.vmem [#allocation0], 66
    %v348 = vld [vmem:[%s347] ss:$8 sm:$0xf0]
    %vm349 = vcmask 1047556
    %v350 = vsel %vm349, %v348, %v346
    %351 = vrot.lane.b32.xlu0 %v350, 16
    %v352 = vpop.permute.xlu0 %351
    %vm353 = vcmask 195712
    %s354 = scalar_lea.vmem %s1, 8
    %355 = vst.msk [vmem:[%s354] sm:$0xff] %vm353, %v352
    %s356 = scalar_lea.vmem [#allocation0], 130
    %v357 = vld [vmem:[%s356] ss:$8 sm:$0xf]
    %s358 = scalar_lea.vmem [#allocation0], 130
    %v359 = vld [vmem:[%s358] ss:$8 sm:$0xf0]
    %vm360 = vcmask 1047556
    %v361 = vsel %vm360, %v359, %v357
    %362 = vrot.lane.b32.xlu0 %v361, 16
    %v363 = vpop.permute.xlu0 %362
    %vm364 = vcmask 195712
    %s365 = scalar_lea.vmem %s1, 16
    %366 = vst.msk [vmem:[%s365] sm:$0xff] %vm364, %v363
    %s367 = scalar_lea.vmem [#allocation0], 194
    %v368 = vld [vmem:[%s367] ss:$8 sm:$0xf]
    %s369 = scalar_lea.vmem [#allocation0], 194
    %v370 = vld [vmem:[%s369] ss:$8 sm:$0xf0]
    %vm371 = vcmask 1047556
    %v372 = vsel %vm371, %v370, %v368
    %373 = vrot.lane.b32.xlu0 %v372, 16
    %v374 = vpop.permute.xlu0 %373
    %vm375 = vcmask 195712
    %s376 = scalar_lea.vmem %s1, 24
    %377 = vst.msk [vmem:[%s376] sm:$0xff] %vm375, %v374
    %s378 = scalar_lea.vmem [#allocation0], 1
    %v379 = vld [vmem:[%s378] ss:$8 sm:$0xf]
    %s380 = scalar_lea.vmem [#allocation0], 1
    %v381 = vld [vmem:[%s380] ss:$8 sm:$0xf0]
    %vm382 = vcmask 1047556
    %v383 = vsel %vm382, %v381, %v379
    %384 = vrot.lane.b32.xlu0 %v383, 8
    %v385 = vpop.permute.xlu0 %384
    %vm386 = vcmask 130112
    %387 = vst.msk [vmem:[%s1] sm:$0xff] %vm386, %v385
    %s388 = scalar_lea.vmem [#allocation0], 257
    %v389 = vld [vmem:[%s388] ss:$8 sm:$0xf]
    %s390 = scalar_lea.vmem [#allocation0], 257
    %v391 = vld [vmem:[%s390] ss:$8 sm:$0xf0]
    %vm392 = vcmask 1047556
    %v393 = vsel %vm392, %v391, %v389
    %394 = vrot.lane.b32.xlu0 %v393, 8
    %v395 = vpop.permute.xlu0 %394
    %vm396 = vcmask 130112
    %s397 = scalar_lea.vmem %s1, 32
    %398 = vst.msk [vmem:[%s397] sm:$0xff] %vm396, %v395
    %s399 = scalar_lea.vmem [#allocation0], 65
    %v400 = vld [vmem:[%s399] ss:$8 sm:$0xf]
    %s401 = scalar_lea.vmem [#allocation0], 65
    %v402 = vld [vmem:[%s401] ss:$8 sm:$0xf0]
    %vm403 = vcmask 1047556
    %v404 = vsel %vm403, %v402, %v400
    %405 = vrot.lane.b32.xlu0 %v404, 8
    %v406 = vpop.permute.xlu0 %405
    %vm407 = vcmask 130112
    %s408 = scalar_lea.vmem %s1, 8
    %409 = vst.msk [vmem:[%s408] sm:$0xff] %vm407, %v406
    %s410 = scalar_lea.vmem [#allocation0], 129
    %v411 = vld [vmem:[%s410] ss:$8 sm:$0xf]
    %s412 = scalar_lea.vmem [#allocation0], 129
    %v413 = vld [vmem:[%s412] ss:$8 sm:$0xf0]
    %vm414 = vcmask 1047556
    %v415 = vsel %vm414, %v413, %v411
    %416 = vrot.lane.b32.xlu0 %v415, 8
    %v417 = vpop.permute.xlu0 %416
    %vm418 = vcmask 130112
    %s419 = scalar_lea.vmem %s1, 16
    %420 = vst.msk [vmem:[%s419] sm:$0xff] %vm418, %v417
    %s421 = scalar_lea.vmem [#allocation0], 193
    %v422 = vld [vmem:[%s421] ss:$8 sm:$0xf]
    %s423 = scalar_lea.vmem [#allocation0], 193
    %v424 = vld [vmem:[%s423] ss:$8 sm:$0xf0]
    %vm425 = vcmask 1047556
    %v426 = vsel %vm425, %v424, %v422
    %427 = vrot.lane.b32.xlu0 %v426, 8
    %v428 = vpop.permute.xlu0 %427
    %vm429 = vcmask 130112
    %s430 = scalar_lea.vmem %s1, 24
    %431 = vst.msk [vmem:[%s430] sm:$0xff] %vm429, %v428
    %432 = vsyncpa [#allocation1], 1

// kernel: prompt_gen_block_v4.1
$region0: #{prompt_gen_block_v4.1}
  #allocation0 [shape = 'u32[]', space=smem, size = 0x4, offset = 0x4, fixed_abs, tag = 'smem constant byte address 0x4 - core index']
  #allocation1 [shape = 'u32[144,128]{1,0:T(1,128)}', space=vmem, size = 0x12000, scoped, tag = 'internal scratch']
  #allocation2 [shape = 'f32[16,64]{1,0:T(8,128)}', space=vmem, size = 0x2000, scoped, tag = 'scratch operand']
  #allocation3 [shape = 'f32[16,256]{1,0:T(8,128)}', space=vmem, size = 0x4000, scoped, tag = 'scratch operand']
  #allocation4 [shape = 'f32[72,512]{1,0:T(8,128)}', space=vmem, size = 0x24000, scoped, tag = 'scratch operand']
  %s0 = inlined_call_operand.vmem [shape: f32[2,4,256], index: 0, kind: input, shape index: {}]
  %s1 = inlined_call_operand.vmem [shape: f32[4,5], index: 1, kind: input, shape index: {}]
  %s2 = inlined_call_operand.vmem [shape: f32[1,5], index: 2, kind: input, shape index: {}]
  %s3 = inlined_call_operand.vmem [shape: f32[5,8,64], index: 3, kind: input, shape index: {}]
  %s4 = inlined_call_operand.vmem [shape: f32[64,256], index: 4, kind: input, shape index: {}]
  %s5 = inlined_call_operand.vmem [shape: f32[8,72], index: 5, kind: input, shape index: {}]
  %s6 = inlined_call_operand.vmem [shape: f32[2,8,256], index: 6, kind: output, shape index: {}]
  %s7 = sld [smem:[#allocation0]]
  $region34: #{prompt_gen_block_v4.1} parent=0
    _
  %s9 = ssub.s32 1, %s7
  %s10 = scalar_select 0, %s9, %s7
  // Predicated region
  $region2: #{prompt_gen_block_v4.1} parent=0 // pred_check
    _
  $region3: #{prompt_gen_block_v4.1} parent=0 // pred_check_branch
    %12 = sbr.rel (0) target = $region5
  $region4: #{prompt_gen_block_v4.1} parent=0 // pred_region
    _
  $region5: #{prompt_gen_block_v4.1} parent=0 // pred_fallthru
    _
  // Predicated region
  $region6: #{prompt_gen_block_v4.1} parent=0 // pred_check
    _
  $region7: #{prompt_gen_block_v4.1} parent=0 // pred_check_branch
    %14 = sbr.rel (0) target = $region9
  $region8: #{prompt_gen_block_v4.1} parent=0 // pred_region
    _
  $region9: #{prompt_gen_block_v4.1} parent=0 // pred_fallthru
    _
  // Predicated region
  $region10: #{prompt_gen_block_v4.1} parent=0 // pred_check
    _
  $region11: #{prompt_gen_block_v4.1} parent=0 // pred_check_branch
    %16 = sbr.rel (0) target = $region13
  $region12: #{prompt_gen_block_v4.1} parent=0 // pred_region
    _
  $region13: #{prompt_gen_block_v4.1} parent=0 // pred_fallthru
    _
  // Predicated region
  $region14: #{prompt_gen_block_v4.1} parent=0 // pred_check
    _
  $region15: #{prompt_gen_block_v4.1} parent=0 // pred_check_branch
    %18 = sbr.rel (0) target = $region17
  $region16: #{prompt_gen_block_v4.1} parent=0 // pred_region
    _
  $region17: #{prompt_gen_block_v4.1} parent=0 // pred_fallthru
    _
  // Predicated region
  $region18: #{prompt_gen_block_v4.1} parent=0 // pred_check
    _
  $region19: #{prompt_gen_block_v4.1} parent=0 // pred_check_branch
    %20 = sbr.rel (0) target = $region21
  $region20: #{prompt_gen_block_v4.1} parent=0 // pred_region
    _
  $region21: #{prompt_gen_block_v4.1} parent=0 // pred_fallthru
    _
  // Predicated region
  $region22: #{prompt_gen_block_v4.1} parent=0 // pred_check
    _
  $region23: #{prompt_gen_block_v4.1} parent=0 // pred_check_branch
    %22 = sbr.rel (0) target = $region25
  $region24: #{prompt_gen_block_v4.1} parent=0 // pred_region
    _
  $region25: #{prompt_gen_block_v4.1} parent=0 // pred_fallthru
    _
  %v23 = vld [vmem:[%s0] sm:$0xff]
  %v24 = vld [vmem:[%s0 + $0x8] sm:$0xff]
  %v27 = vcombine.high %v23, %v23
  %v28 = vcombine.high %v24, %v24
  %vm31 = vcmask 1043456
  %v32 = vsel %vm31, %v23, 0.0
  %v33 = vsel %vm31, %v27, 0.0
  %v34 = vadd.f32 %v32, %v33
  %35 = vadd.xlane.f32.xlu0 %v34
  %v36 = vpop.xlane.xlu0 %35
  %v37 = vsel %vm31, %v24, 0.0
  %v38 = vsel %vm31, %v28, 0.0
  %v39 = vadd.f32 %v37, %v38
  %40 = vadd.xlane.f32.xlu0 %v39
  %v41 = vpop.xlane.xlu0 %40
  %v42 = vrcp.pop 256.0
  %v43 = vmul.f32 %v36, %v42
  %v44 = vmul.f32 %v41, %v42
  %v45 = vld [vmem:[%s2] sm:$0x1]
  %v47 = vlaneseq
  %v48 = vshrl.u32 %v47, 7
  %v49 = vsub.s32 0, %v48
  %v50 = vrot.slane %v45, %v49
  %v52 = vadd.f32 %v50, 0.0
  %v53 = vld [vmem:[%s1] sm:$0x1]
  %v54 = vlaneseq
  %v55 = vshrl.u32 %v54, 7
  %v56 = vsub.s32 0, %v55
  %v57 = vrot.slane %v43, %v56
  %v58 = vlaneseq
  %v59 = vshrl.u32 %v58, 7
  %v60 = vsub.s32 0, %v59
  %v61 = vrot.slane %v44, %v60
  %v62 = vlaneseq
  %v63 = vshrl.u32 %v62, 7
  %v64 = vsub.s32 0, %v63
  %v65 = vrot.slane %v53, %v64
  %68 = vbcast.lane.b32.xlu0 %v65, 256
  %v69 = vpop.permute.xlu0 %68
  %v71 = vmul.f32 %v57, %v69
  %v72 = vmul.f32 %v61, %v69
  %75 = vset.pattern.permute.xlu0 0
  %76 = vperm.xlu0 %75, %v71
  %v77 = vpop.permute.xlu0 %76
  %78 = vset.pattern.permute.xlu0 0
  %79 = vperm.xlu0 %78, %v72
  %v80 = vpop.permute.xlu0 %79
  %v81 = vlaneseq
  %v82 = vand.u32 %v81, 127
  %v83 = vlaneseq
  %v84 = vshrl.u32 %v83, 7
  %v85 = vsub.s32 %v82, %v84
  %v86 = vrot.slane %v77, %v85
  %v87 = vlaneseq
  %v88 = vshrl.u32 %v87, 7
  %v89 = vsub.s32 %v82, %v88
  %v90 = vrot.slane %v80, %v89
  %vm91 = vcmask 1041409
  %v92 = vsel %vm91, %v90, %v86
  %v94 = vadd.f32 %v52, %v92
  %v95 = vld [vmem:[%s1 + $0x1] sm:$0x1]
  %v96 = vlaneseq
  %v97 = vshrl.u32 %v96, 7
  %v98 = vsub.s32 1, %v97
  %v99 = vrot.slane %v43, %v98
  %v100 = vlaneseq
  %v101 = vshrl.u32 %v100, 7
  %v102 = vsub.s32 1, %v101
  %v103 = vrot.slane %v44, %v102
  %v104 = vlaneseq
  %v105 = vshrl.u32 %v104, 7
  %v106 = vsub.s32 0, %v105
  %v107 = vrot.slane %v95, %v106
  %110 = vbcast.lane.b32.xlu0 %v107, 256
  %v111 = vpop.permute.xlu0 %110
  %v113 = vmul.f32 %v99, %v111
  %v114 = vmul.f32 %v103, %v111
  %117 = vset.pattern.permute.xlu0 0
  %118 = vperm.xlu0 %117, %v113
  %v119 = vpop.permute.xlu0 %118
  %120 = vset.pattern.permute.xlu0 0
  %121 = vperm.xlu0 %120, %v114
  %v122 = vpop.permute.xlu0 %121
  %v123 = vlaneseq
  %v124 = vshrl.u32 %v123, 7
  %v125 = vsub.s32 %v82, %v124
  %v126 = vrot.slane %v119, %v125
  %v127 = vlaneseq
  %v128 = vshrl.u32 %v127, 7
  %v129 = vsub.s32 %v82, %v128
  %v130 = vrot.slane %v122, %v129
  %v131 = vsel %vm91, %v130, %v126
  %v133 = vadd.f32 %v94, %v131
  %v134 = vld [vmem:[%s1 + $0x2] sm:$0x1]
  %v135 = vlaneseq
  %v136 = vshrl.u32 %v135, 7
  %v137 = vsub.s32 2, %v136
  %v138 = vrot.slane %v43, %v137
  %v139 = vlaneseq
  %v140 = vshrl.u32 %v139, 7
  %v141 = vsub.s32 2, %v140
  %v142 = vrot.slane %v44, %v141
  %v143 = vlaneseq
  %v144 = vshrl.u32 %v143, 7
  %v145 = vsub.s32 0, %v144
  %v146 = vrot.slane %v134, %v145
  %149 = vbcast.lane.b32.xlu0 %v146, 256
  %v150 = vpop.permute.xlu0 %149
  %v152 = vmul.f32 %v138, %v150
  %v153 = vmul.f32 %v142, %v150
  %156 = vset.pattern.permute.xlu0 0
  %157 = vperm.xlu0 %156, %v152
  %v158 = vpop.permute.xlu0 %157
  %159 = vset.pattern.permute.xlu0 0
  %160 = vperm.xlu0 %159, %v153
  %v161 = vpop.permute.xlu0 %160
  %v162 = vlaneseq
  %v163 = vshrl.u32 %v162, 7
  %v164 = vsub.s32 %v82, %v163
  %v165 = vrot.slane %v158, %v164
  %v166 = vlaneseq
  %v167 = vshrl.u32 %v166, 7
  %v168 = vsub.s32 %v82, %v167
  %v169 = vrot.slane %v161, %v168
  %v170 = vsel %vm91, %v169, %v165
  %v172 = vadd.f32 %v133, %v170
  %v173 = vld [vmem:[%s1 + $0x3] sm:$0x1]
  %v174 = vlaneseq
  %v175 = vshrl.u32 %v174, 7
  %v176 = vsub.s32 3, %v175
  %v177 = vrot.slane %v43, %v176
  %v178 = vlaneseq
  %v179 = vshrl.u32 %v178, 7
  %v180 = vsub.s32 3, %v179
  %v181 = vrot.slane %v44, %v180
  %v182 = vlaneseq
  %v183 = vshrl.u32 %v182, 7
  %v184 = vsub.s32 0, %v183
  %v185 = vrot.slane %v173, %v184
  %188 = vbcast.lane.b32.xlu0 %v185, 256
  %v189 = vpop.permute.xlu0 %188
  %v191 = vmul.f32 %v177, %v189
  %v192 = vmul.f32 %v181, %v189
  %195 = vset.pattern.permute.xlu0 0
  %196 = vperm.xlu0 %195, %v191
  %v197 = vpop.permute.xlu0 %196
  %198 = vset.pattern.permute.xlu0 0
  %199 = vperm.xlu0 %198, %v192
  %v200 = vpop.permute.xlu0 %199
  %v201 = vlaneseq
  %v202 = vshrl.u32 %v201, 7
  %v203 = vsub.s32 %v82, %v202
  %v204 = vrot.slane %v197, %v203
  %v205 = vlaneseq
  %v206 = vshrl.u32 %v205, 7
  %v207 = vsub.s32 %v82, %v206
  %v208 = vrot.slane %v200, %v207
  %v209 = vsel %vm91, %v208, %v204
  %v211 = vadd.f32 %v172, %v209
  %vm212 = vcmask 33792
  %v213 = vsel %vm212, %v211, -inf
  %214 = vmax.xlane.f32.xlu0 %v213
  %v215 = vpop.xlane.xlu0 %214
  %v216 = vsub.f32 %v211, %v215
  %v217 = vmul.f32 %v216, 1.442695
  %v218 = vpow.pop %v217
  %v219 = vsel %vm212, %v218, 0.0
  %220 = vadd.xlane.f32.xlu0 %v219
  %v221 = vpop.xlane.xlu0 %220
  %v222 = vrcp.pop %v221
  %v223 = vmul.f32 %v218, %v222
  %v224 = vld [vmem:[%s3] sm:$0xff]
  %s226 = vtos %v223
  %v227 = vstv %s226
  %v229 = vmul.f32 %v227, %v224
  %v230 = vadd.f32 %v229, 0.0
  %s231 = scalar_lea.vmem %s3, 8
  %v232 = vld [vmem:[%s231] sm:$0xff]
  %233 = vrot.lane.b32.xlu0 %v223, 127
  %v234 = vpop.permute.xlu0 %233
  %s235 = vtos %v234
  %v236 = vstv %s235
  %v238 = vmul.f32 %v236, %v232
  %v239 = vadd.f32 %v230, %v238
  %s240 = scalar_lea.vmem %s3, 16
  %v241 = vld [vmem:[%s240] sm:$0xff]
  %242 = vrot.lane.b32.xlu0 %v223, 126
  %v243 = vpop.permute.xlu0 %242
  %s244 = vtos %v243
  %v245 = vstv %s244
  %v247 = vmul.f32 %v245, %v241
  %v248 = vadd.f32 %v239, %v247
  %s249 = scalar_lea.vmem %s3, 24
  %v250 = vld [vmem:[%s249] sm:$0xff]
  %251 = vrot.lane.b32.xlu0 %v223, 125
  %v252 = vpop.permute.xlu0 %251
  %s253 = vtos %v252
  %v254 = vstv %s253
  %v256 = vmul.f32 %v254, %v250
  %v257 = vadd.f32 %v248, %v256
  %s258 = scalar_lea.vmem %s3, 32
  %v259 = vld [vmem:[%s258] sm:$0xff]
  %260 = vrot.lane.b32.xlu0 %v223, 124
  %v261 = vpop.permute.xlu0 %260
  %s262 = vtos %v261
  %v263 = vstv %s262
  %v265 = vmul.f32 %v263, %v259
  %v266 = vadd.f32 %v257, %v265
  %vm267 = vcmask 523264
  %268 = vst.msk [vmem:[#allocation2] sm:$0xff] %vm267, %v266
  %v269 = vld [vmem:[%s3] sm:$0xff]
  %v270 = vrot.slane %v223, 1
  %s271 = vtos %v270
  %v272 = vstv %s271
  %v274 = vmul.f32 %v272, %v269
  %v275 = vadd.f32 %v274, 0.0
  %v276 = vld [vmem:[%s231] sm:$0xff]
  %277 = vrot.lane.b32.xlu0 %v270, 127
  %v278 = vpop.permute.xlu0 %277
  %s279 = vtos %v278
  %v280 = vstv %s279
  %v282 = vmul.f32 %v280, %v276
  %v283 = vadd.f32 %v275, %v282
  %v284 = vld [vmem:[%s240] sm:$0xff]
  %285 = vrot.lane.b32.xlu0 %v270, 126
  %v286 = vpop.permute.xlu0 %285
  %s287 = vtos %v286
  %v288 = vstv %s287
  %v290 = vmul.f32 %v288, %v284
  %v291 = vadd.f32 %v283, %v290
  %v292 = vld [vmem:[%s249] sm:$0xff]
  %293 = vrot.lane.b32.xlu0 %v270, 125
  %v294 = vpop.permute.xlu0 %293
  %s295 = vtos %v294
  %v296 = vstv %s295
  %v298 = vmul.f32 %v296, %v292
  %v299 = vadd.f32 %v291, %v298
  %v300 = vld [vmem:[%s258] sm:$0xff]
  %301 = vrot.lane.b32.xlu0 %v270, 124
  %v302 = vpop.permute.xlu0 %301
  %s303 = vtos %v302
  %v304 = vstv %s303
  %v306 = vmul.f32 %v304, %v300
  %v307 = vadd.f32 %v299, %v306
  %308 = vst.msk [vmem:[#allocation2 + $0x8] sm:$0xff] %vm267, %v307
  %v309 = vld [vmem:[#allocation2] sm:$0xff]
  %v310 = vld [vmem:[#allocation2 + $0x8] sm:$0xff]
  %v311 = vld [vmem:[%s4] sm:$0xff]
  %v312 = vld [vmem:[%s4 + $0x8] sm:$0xff]
  %v313 = vld [vmem:[%s4 + $0x10] sm:$0xff]
  %v314 = vld [vmem:[%s4 + $0x18] sm:$0xff]
  %v315 = vld [vmem:[%s4 + $0x20] sm:$0xff]
  %v316 = vld [vmem:[%s4 + $0x28] sm:$0xff]
  %v317 = vld [vmem:[%s4 + $0x30] sm:$0xff]
  %v318 = vld [vmem:[%s4 + $0x38] sm:$0xff]
  %v319 = vld [vmem:[%s4 + $0x40] sm:$0xff]
  %v320 = vld [vmem:[%s4 + $0x48] sm:$0xff]
  %v321 = vld [vmem:[%s4 + $0x50] sm:$0xff]
  %v322 = vld [vmem:[%s4 + $0x58] sm:$0xff]
  %v323 = vld [vmem:[%s4 + $0x60] sm:$0xff]
  %v324 = vld [vmem:[%s4 + $0x68] sm:$0xff]
  %v325 = vld [vmem:[%s4 + $0x70] sm:$0xff]
  %v326 = vld [vmem:[%s4 + $0x78] sm:$0xff]
  %v328 = vsel %vm267, %v309, 0
  %v331 = vsel %vm267, %v310, 0
  %333 = vmatprep.subr.mxu0 %v312
  %334 = vmatpush1.msra.mxu0 %v311
  %335 = vmatprep.subr.mxu0 %v314
  %336 = vmatpush1.msra.mxu0 %v313
  %337 = vmatprep.subr.mxu0 %v316
  %338 = vmatpush1.msra.mxu0 %v315
  %339 = vmatprep.subr.mxu0 %v318
  %340 = vmatpush1.msra.mxu0 %v317
  %341 = vmatprep.subr.mxu0 %v320
  %342 = vmatpush1.msra.mxu0 %v319
  %343 = vmatprep.subr.mxu0 %v322
  %344 = vmatpush1.msra.mxu0 %v321
  %345 = vmatprep.subr.mxu0 %v324
  %346 = vmatpush1.msra.mxu0 %v323
  %347 = vmatprep.subr.mxu0 %v326
  %348 = vmatpush1.msra.mxu0 %v325
  %349 = vmatprep.subr.mxu0 0.0
  %350 = vmatpush1.msra.mxu0 0.0
  %351 = vmatprep.subr.mxu0 0.0
  %352 = vmatpush1.msra.mxu0 0.0
  %353 = vmatprep.subr.mxu0 0.0
  %354 = vmatpush1.msra.mxu0 0.0
  %355 = vmatprep.subr.mxu0 0.0
  %356 = vmatpush1.msra.mxu0 0.0
  %357 = vmatprep.subr.mxu0 0.0
  %358 = vmatpush1.msra.mxu0 0.0
  %359 = vmatprep.subr.mxu0 0.0
  %360 = vmatpush1.msra.mxu0 0.0
  %361 = vmatprep.subr.mxu0 0.0
  %362 = vmatpush1.msra.mxu0 0.0
  %363 = vmatprep.subr.mxu0 0.0
  %364 = vmatpush1.msra.mxu0 0.0
  %365 = vmatprep.subr.mxu0 0.0
  %366 = vmatpush1.msra.mxu0 0.0
  %367 = vmatprep.subr.mxu0 0.0
  %368 = vmatpush1.msra.mxu0 0.0
  %369 = vmatprep.subr.mxu0 0.0
  %370 = vmatpush1.msra.mxu0 0.0
  %371 = vmatprep.subr.mxu0 0.0
  %372 = vmatpush1.msra.mxu0 0.0
  %373 = vmatprep.subr.mxu0 0.0
  %374 = vmatpush1.msra.mxu0 0.0
  %375 = vmatprep.subr.mxu0 0.0
  %376 = vmatpush1.msra.mxu0 0.0
  %377 = vmatprep.subr.mxu0 0.0
  %378 = vmatpush1.msra.mxu0 0.0
  %379 = vmatprep.subr.mxu0 0.0
  %380 = vmatpush1.msra.mxu0 0.0
  %381 = vmatprep.subr.mxu0 0.0
  %382 = vmatpush1.msra.mxu0 0.0
  %383 = vmatprep.subr.mxu0 0.0
  %384 = vmatpush1.msra.mxu0 0.0
  %385 = vmatprep.subr.mxu0 0.0
  %386 = vmatpush1.msra.mxu0 0.0
  %387 = vmatprep.subr.mxu0 0.0
  %388 = vmatpush1.msra.mxu0 0.0
  %389 = vmatprep.subr.mxu0 0.0
  %390 = vmatpush1.msra.mxu0 0.0
  %391 = vmatprep.subr.mxu0 0.0
  %392 = vmatpush1.msra.mxu0 0.0
  %393 = vmatprep.subr.mxu0 0.0
  %394 = vmatpush1.msra.mxu0 0.0
  %395 = vmatprep.subr.mxu0 0.0
  %396 = vmatpush1.msra.mxu0 0.0
  %397 = vmatprep.mubr.f32.mxu0 0.0
  %398 = vmatmul.mubr.f32.gmra.mrb[0].mxu0 %v328
  %v399 = vpop.f32.mrb[0].mxu0
  %v400 = vadd.f32 0.0, %v399
  %v401 = vpop.f32.mrb[0].mxu0
  %v402 = vadd.f32 0.0, %v401
  %403 = vmatprep.mubr.f32.mxu0 0.0
  %404 = vmatmul.mubr.f32.gmra.mrb[0].mxu0 %v331
  %v405 = vpop.f32.mrb[0].mxu0
  %v406 = vadd.f32 0.0, %v405
  %v407 = vpop.f32.mrb[0].mxu0
  %v408 = vadd.f32 0.0, %v407
  %409 = vdwg.mxu0
  %410 = vst [vmem:[#allocation3] sm:$0xff] %v400
  %411 = vst [vmem:[#allocation3 + $0x8] sm:$0xff] %v402
  %412 = vst [vmem:[#allocation3 + $0x10] sm:$0xff] %v406
  %413 = vst [vmem:[#allocation3 + $0x18] sm:$0xff] %v408
  %v414 = vadd.s32 %v82, 128
  %v415 = vadd.s32 %v82, 17
  %v416 = vadd.s32 %v414, 17
  %vm417 = vcmp.lt.s32.totalorder %v415, 0
  %v418 = vsub.s32 0, %v415
  %v419 = vsel %vm417, %v418, %v415
  %v420 = vshrl.u32 %v419, 4
  %v421 = vand.u32 %v419, 15
  %v422 = vsub.s32 0, %v421
  %v423 = vsel %vm417, %v422, %v421
  %vm424 = vcmp.lt.s32.totalorder %v416, 0
  %v425 = vsub.s32 0, %v416
  %v426 = vsel %vm424, %v425, %v416
  %v427 = vshrl.u32 %v426, 4
  %v428 = vand.u32 %v426, 15
  %v429 = vsub.s32 0, %v428
  %v430 = vsel %vm424, %v429, %v428
  %vm431 = vcmp.ne.s32.totalorder %v423, 0
  %vm432 = vcmp.ne.s32.totalorder %v430, 0
  %vm433 = vcmp.lt.s32.totalorder %v423, 0
  %vm434 = vcmp.lt.s32.totalorder %v430, 0
  %vm435 = vmand %vm433, %vm431
  %vm436 = vmand %vm434, %vm432
  %v437 = vadd.s32 %v423, 16
  %v438 = vadd.s32 %v430, 16
  %v439 = vsel %vm435, %v437, %v423
  %v440 = vsel %vm436, %v438, %v430
  %vm441 = vcmp.ge.s32.totalorder %v439, 1
  %vm442 = vcmp.ge.s32.totalorder %v440, 1
  %v443 = vadd.s32 %v82, 15
  %v444 = vadd.s32 %v414, 15
  %vm445 = vcmp.lt.s32.totalorder %v443, 0
  %v446 = vsub.s32 0, %v443
  %v447 = vsel %vm445, %v446, %v443
  %v448 = vshrl.u32 %v447, 4
  %v449 = vand.u32 %v447, 15
  %v450 = vsub.s32 0, %v449
  %v451 = vsel %vm445, %v450, %v449
  %vm452 = vcmp.lt.s32.totalorder %v444, 0
  %v453 = vsub.s32 0, %v444
  %v454 = vsel %vm452, %v453, %v444
  %v455 = vshrl.u32 %v454, 4
  %v456 = vand.u32 %v454, 15
  %v457 = vsub.s32 0, %v456
  %v458 = vsel %vm452, %v457, %v456
  %vm459 = vcmp.ne.s32.totalorder %v451, 0
  %vm460 = vcmp.ne.s32.totalorder %v458, 0
  %vm461 = vcmp.lt.s32.totalorder %v451, 0
  %vm462 = vcmp.lt.s32.totalorder %v458, 0
  %vm463 = vmand %vm461, %vm459
  %vm464 = vmand %vm462, %vm460
  %v465 = vadd.s32 %v451, 16
  %v466 = vadd.s32 %v458, 16
  %v467 = vsel %vm463, %v465, %v451
  %v468 = vsel %vm464, %v466, %v458
  %vm469 = vcmp.lt.s32.totalorder %v467, 15
  %vm470 = vcmp.lt.s32.totalorder %v468, 15
  %v471 = vadd.s32 %v82, 1
  %v472 = vadd.s32 %v414, 1
  %vm473 = vcmp.lt.s32.totalorder %v471, 0
  %v474 = vsub.s32 0, %v471
  %v475 = vsel %vm473, %v474, %v471
  %v476 = vshrl.u32 %v475, 4
  %v477 = vand.u32 %v475, 15
  %v478 = vsub.s32 0, %v477
  %v479 = vsel %vm473, %v478, %v477
  %vm480 = vcmp.lt.s32.totalorder %v472, 0
  %v481 = vsub.s32 0, %v472
  %v482 = vsel %vm480, %v481, %v472
  %v483 = vshrl.u32 %v482, 4
  %v484 = vand.u32 %v482, 15
  %v485 = vsub.s32 0, %v484
  %v486 = vsel %vm480, %v485, %v484
  %vm487 = vcmp.ne.s32.totalorder %v479, 0
  %vm488 = vcmp.ne.s32.totalorder %v486, 0
  %vm489 = vcmp.lt.s32.totalorder %v479, 0
  %vm490 = vcmp.lt.s32.totalorder %v486, 0
  %vm491 = vmand %vm489, %vm487
  %vm492 = vmand %vm490, %vm488
  %v493 = vadd.s32 %v479, 16
  %v494 = vadd.s32 %v486, 16
  %v495 = vsel %vm491, %v493, %v479
  %v496 = vsel %vm492, %v494, %v486
  %vm497 = vcmp.ge.s32.totalorder %v495, 1
  %vm498 = vcmp.ge.s32.totalorder %v496, 1
  %vm499 = vcmp.lt.s32.totalorder %v82, 0
  %v500 = vsub.s32 0, %v82
  %v501 = vsel %vm499, %v500, %v82
  %v502 = vshrl.u32 %v501, 4
  %v503 = vand.u32 %v501, 15
  %v504 = vsub.s32 0, %v503
  %v505 = vsel %vm499, %v504, %v503
  %vm506 = vcmp.lt.s32.totalorder %v414, 0
  %v507 = vsub.s32 0, %v414
  %v508 = vsel %vm506, %v507, %v414
  %v509 = vshrl.u32 %v508, 4
  %v510 = vand.u32 %v508, 15
  %v511 = vsub.s32 0, %v510
  %v512 = vsel %vm506, %v511, %v510
  %vm513 = vcmp.ne.s32.totalorder %v505, 0
  %vm514 = vcmp.ne.s32.totalorder %v512, 0
  %vm515 = vcmp.lt.s32.totalorder %v505, 0
  %vm516 = vcmp.lt.s32.totalorder %v512, 0
  %vm517 = vmand %vm515, %vm513
  %vm518 = vmand %vm516, %vm514
  %v519 = vadd.s32 %v505, 16
  %v520 = vadd.s32 %v512, 16
  %v521 = vsel %vm517, %v519, %v505
  %v522 = vsel %vm518, %v520, %v512
  %vm523 = vcmp.lt.s32.totalorder %v521, 15
  %vm524 = vcmp.lt.s32.totalorder %v522, 15
  %vm525 = vcmp.ge.s32.totalorder %v521, 1
  %vm526 = vcmp.ge.s32.totalorder %v522, 1
  %527 = vst [vmem:[#allocation4] sm:$0xff] 0.0
  %528 = vst [vmem:[#allocation4 + $0x8] sm:$0xff] 0.0
  %529 = vst [vmem:[#allocation4 + $0x10] sm:$0xff] 0.0
  %530 = vst [vmem:[#allocation4 + $0x18] sm:$0xff] 0.0
  %531 = vst [vmem:[#allocation4 + $0x20] sm:$0xff] 0.0
  %532 = vst [vmem:[#allocation4 + $0x28] sm:$0xff] 0.0
  %533 = vst [vmem:[#allocation4 + $0x30] sm:$0xff] 0.0
  %534 = vst [vmem:[#allocation4 + $0x38] sm:$0xff] 0.0
  %535 = vst [vmem:[#allocation4 + $0x40] sm:$0xff] 0.0
  %536 = vst [vmem:[#allocation4 + $0x48] sm:$0xff] 0.0
  %537 = vst [vmem:[#allocation4 + $0x50] sm:$0xff] 0.0
  %538 = vst [vmem:[#allocation4 + $0x58] sm:$0xff] 0.0
  %539 = vst [vmem:[#allocation4 + $0x60] sm:$0xff] 0.0
  %540 = vst [vmem:[#allocation4 + $0x68] sm:$0xff] 0.0
  %541 = vst [vmem:[#allocation4 + $0x70] sm:$0xff] 0.0
  %542 = vst [vmem:[#allocation4 + $0x78] sm:$0xff] 0.0
  %543 = vst [vmem:[#allocation4 + $0x80] sm:$0xff] 0.0
  %544 = vst [vmem:[#allocation4 + $0x88] sm:$0xff] 0.0
  %545 = vst [vmem:[#allocation4 + $0x90] sm:$0xff] 0.0
  %546 = vst [vmem:[#allocation4 + $0x98] sm:$0xff] 0.0
  %547 = vst [vmem:[#allocation4 + $0xa0] sm:$0xff] 0.0
  %548 = vst [vmem:[#allocation4 + $0xa8] sm:$0xff] 0.0
  %549 = vst [vmem:[#allocation4 + $0xb0] sm:$0xff] 0.0
  %550 = vst [vmem:[#allocation4 + $0xb8] sm:$0xff] 0.0
  %551 = vst [vmem:[#allocation4 + $0xc0] sm:$0xff] 0.0
  %552 = vst [vmem:[#allocation4 + $0xc8] sm:$0xff] 0.0
  %553 = vst [vmem:[#allocation4 + $0xd0] sm:$0xff] 0.0
  %554 = vst [vmem:[#allocation4 + $0xd8] sm:$0xff] 0.0
  %555 = vst [vmem:[#allocation4 + $0xe0] sm:$0xff] 0.0
  %556 = vst [vmem:[#allocation4 + $0xe8] sm:$0xff] 0.0
  %557 = vst [vmem:[#allocation4 + $0xf0] sm:$0xff] 0.0
  %558 = vst [vmem:[#allocation4 + $0xf8] sm:$0xff] 0.0
  %559 = vst [vmem:[#allocation4 + $0x100] sm:$0xff] 0.0
  %560 = vst [vmem:[#allocation4 + $0x108] sm:$0xff] 0.0
  %561 = vst [vmem:[#allocation4 + $0x110] sm:$0xff] 0.0
  %562 = vst [vmem:[#allocation4 + $0x118] sm:$0xff] 0.0
  %v563 = vld [vmem:[#allocation3] sm:$0xff]
  %v564 = vld [vmem:[#allocation3 + $0x8] sm:$0xff]
  %v565 = vsel %vm441, %v563, 0.0
  %v566 = vsel %vm442, %v564, 0.0
  %569 = vrot.lane.b32.xlu0 %v565, 17
  %v570 = vpop.permute.xlu0 %569
  %571 = vrot.lane.b32.xlu0 %v566, 17
  %v572 = vpop.permute.xlu0 %571
  %vm573 = vcmask 138240
  %v574 = vsel %vm573, %v570, %v572
  %vm577 = vcmask 1047688
  %578 = vst.msk [vmem:[#allocation4] sm:$0xff] %vm577, %v570
  %579 = vst [vmem:[#allocation4 + $0x8] sm:$0xff] %v574
  %v580 = vld [vmem:[#allocation3] sm:$0xff]
  %v581 = vld [vmem:[#allocation3 + $0x8] sm:$0xff]
  %584 = vrot.lane.b32.xlu0 %v580, 16
  %v585 = vpop.permute.xlu0 %584
  %586 = vrot.lane.b32.xlu0 %v581, 16
  %v587 = vpop.permute.xlu0 %586
  %vm588 = vcmask 130048
  %v589 = vsel %vm588, %v585, %v587
  %vm592 = vcmask 1047680
  %593 = vst.msk [vmem:[#allocation4 + $0x20] sm:$0xff] %vm592, %v585
  %594 = vst [vmem:[#allocation4 + $0x28] sm:$0xff] %v589
  %v595 = vld [vmem:[#allocation3] sm:$0xff]
  %v596 = vld [vmem:[#allocation3 + $0x8] sm:$0xff]
  %v597 = vsel %vm469, %v595, 0.0
  %v598 = vsel %vm470, %v596, 0.0
  %601 = vrot.lane.b32.xlu0 %v597, 15
  %v602 = vpop.permute.xlu0 %601
  %603 = vrot.lane.b32.xlu0 %v598, 15
  %v604 = vpop.permute.xlu0 %603
  %vm605 = vcmask 121856
  %v606 = vsel %vm605, %v602, %v604
  %vm609 = vcmask 1047672
  %610 = vst.msk [vmem:[#allocation4 + $0x40] sm:$0xff] %vm609, %v602
  %611 = vst [vmem:[#allocation4 + $0x48] sm:$0xff] %v606
  %v612 = vld [vmem:[#allocation3] sm:$0xff]
  %v613 = vld [vmem:[#allocation3 + $0x8] sm:$0xff]
  %v614 = vsel %vm497, %v612, 0.0
  %v615 = vsel %vm498, %v613, 0.0
  %618 = vrot.lane.b32.xlu0 %v614, 1
  %v619 = vpop.permute.xlu0 %618
  %620 = vrot.lane.b32.xlu0 %v615, 1
  %v621 = vpop.permute.xlu0 %620
  %vm622 = vcmask 7168
  %v623 = vsel %vm622, %v619, %v621
  %vm626 = vcmask 1047560
  %627 = vst.msk [vmem:[#allocation4 + $0x60] sm:$0xff] %vm626, %v619
  %628 = vst [vmem:[#allocation4 + $0x68] sm:$0xff] %v623
  %v629 = vld [vmem:[#allocation3] sm:$0xff]
  %v630 = vld [vmem:[#allocation3 + $0x8] sm:$0xff]
  %631 = vst [vmem:[#allocation4 + $0x80] sm:$0xff] %v629
  %632 = vst [vmem:[#allocation4 + $0x88] sm:$0xff] %v630
  %v633 = vld [vmem:[#allocation3] sm:$0xff]
  %v634 = vld [vmem:[#allocation3 + $0x8] sm:$0xff]
  %637 = vrot.lane.b32.xlu0 %v633, 127
  %v638 = vpop.permute.xlu0 %637
  %639 = vrot.lane.b32.xlu0 %v634, 127
  %v640 = vpop.permute.xlu0 %639
  %vm641 = vcmask 1039360
  %v642 = vsel %vm641, %v638, %v640
  %v645 = vsel %vm523, %v642, 0.0
  %v646 = vsel %vm524, %v640, 0.0
  %647 = vst [vmem:[#allocation4 + $0xa0] sm:$0xff] %v645
  %648 = vst.msk [vmem:[#allocation4 + $0xa8] sm:$0xff] %vm641, %v646
  %v649 = vld [vmem:[#allocation3] sm:$0xff]
  %v650 = vld [vmem:[#allocation3 + $0x8] sm:$0xff]
  %653 = vrot.lane.b32.xlu0 %v649, 113
  %v654 = vpop.permute.xlu0 %653
  %655 = vrot.lane.b32.xlu0 %v650, 113
  %v656 = vpop.permute.xlu0 %655
  %vm657 = vcmask 924672
  %v658 = vsel %vm657, %v654, %v656
  %v661 = vsel %vm525, %v658, 0.0
  %v662 = vsel %vm526, %v656, 0.0
  %663 = vst [vmem:[#allocation4 + $0xc0] sm:$0xff] %v661
  %664 = vst.msk [vmem:[#allocation4 + $0xc8] sm:$0xff] %vm657, %v662
  %v665 = vld [vmem:[#allocation3] sm:$0xff]
  %v666 = vld [vmem:[#allocation3 + $0x8] sm:$0xff]
  %669 = vrot.lane.b32.xlu0 %v665, 112
  %v670 = vpop.permute.xlu0 %669
  %671 = vrot.lane.b32.xlu0 %v666, 112
  %v672 = vpop.permute.xlu0 %671
  %vm673 = vcmask 916480
  %v674 = vsel %vm673, %v670, %v672
  %677 = vst [vmem:[#allocation4 + $0xe0] sm:$0xff] %v674
  %678 = vst.msk [vmem:[#allocation4 + $0xe8] sm:$0xff] %vm673, %v672
  %v679 = vld [vmem:[#allocation3] sm:$0xff]
  %v680 = vld [vmem:[#allocation3 + $0x8] sm:$0xff]
  %683 = vrot.lane.b32.xlu0 %v679, 111
  %v684 = vpop.permute.xlu0 %683
  %685 = vrot.lane.b32.xlu0 %v680, 111
  %v686 = vpop.permute.xlu0 %685
  %vm687 = vcmask 908288
  %v688 = vsel %vm687, %v684, %v686
  %v691 = vsel %vm523, %v688, 0.0
  %v692 = vsel %vm524, %v686, 0.0
  %693 = vst [vmem:[#allocation4 + $0x100] sm:$0xff] %v691
  %694 = vst.msk [vmem:[#allocation4 + $0x108] sm:$0xff] %vm687, %v692
  %v695 = vld [vmem:[#allocation3 + $0x10] sm:$0xff]
  %v696 = vld [vmem:[#allocation3 + $0x18] sm:$0xff]
  %v697 = vsel %vm441, %v695, 0.0
  %v698 = vsel %vm442, %v696, 0.0
  %701 = vrot.lane.b32.xlu0 %v697, 17
  %v702 = vpop.permute.xlu0 %701
  %703 = vrot.lane.b32.xlu0 %v698, 17
  %v704 = vpop.permute.xlu0 %703
  %v705 = vsel %vm573, %v702, %v704
  %708 = vst.msk [vmem:[#allocation4 + $0x10] sm:$0xff] %vm577, %v702
  %709 = vst [vmem:[#allocation4 + $0x18] sm:$0xff] %v705
  %v710 = vld [vmem:[#allocation3 + $0x10] sm:$0xff]
  %v711 = vld [vmem:[#allocation3 + $0x18] sm:$0xff]
  %714 = vrot.lane.b32.xlu0 %v710, 16
  %v715 = vpop.permute.xlu0 %714
  %716 = vrot.lane.b32.xlu0 %v711, 16
  %v717 = vpop.permute.xlu0 %716
  %v718 = vsel %vm588, %v715, %v717
  %721 = vst.msk [vmem:[#allocation4 + $0x30] sm:$0xff] %vm592, %v715
  %722 = vst [vmem:[#allocation4 + $0x38] sm:$0xff] %v718
  %v723 = vld [vmem:[#allocation3 + $0x10] sm:$0xff]
  %v724 = vld [vmem:[#allocation3 + $0x18] sm:$0xff]
  %v725 = vsel %vm469, %v723, 0.0
  %v726 = vsel %vm470, %v724, 0.0
  %729 = vrot.lane.b32.xlu0 %v725, 15
  %v730 = vpop.permute.xlu0 %729
  %731 = vrot.lane.b32.xlu0 %v726, 15
  %v732 = vpop.permute.xlu0 %731
  %v733 = vsel %vm605, %v730, %v732
  %736 = vst.msk [vmem:[#allocation4 + $0x50] sm:$0xff] %vm609, %v730
  %737 = vst [vmem:[#allocation4 + $0x58] sm:$0xff] %v733
  %v738 = vld [vmem:[#allocation3 + $0x10] sm:$0xff]
  %v739 = vld [vmem:[#allocation3 + $0x18] sm:$0xff]
  %v740 = vsel %vm497, %v738, 0.0
  %v741 = vsel %vm498, %v739, 0.0
  %744 = vrot.lane.b32.xlu0 %v740, 1
  %v745 = vpop.permute.xlu0 %744
  %746 = vrot.lane.b32.xlu0 %v741, 1
  %v747 = vpop.permute.xlu0 %746
  %v748 = vsel %vm622, %v745, %v747
  %751 = vst.msk [vmem:[#allocation4 + $0x70] sm:$0xff] %vm626, %v745
  %752 = vst [vmem:[#allocation4 + $0x78] sm:$0xff] %v748
  %v753 = vld [vmem:[#allocation3 + $0x10] sm:$0xff]
  %v754 = vld [vmem:[#allocation3 + $0x18] sm:$0xff]
  %755 = vst [vmem:[#allocation4 + $0x90] sm:$0xff] %v753
  %756 = vst [vmem:[#allocation4 + $0x98] sm:$0xff] %v754
  %v757 = vld [vmem:[#allocation3 + $0x10] sm:$0xff]
  %v758 = vld [vmem:[#allocation3 + $0x18] sm:$0xff]
  %761 = vrot.lane.b32.xlu0 %v757, 127
  %v762 = vpop.permute.xlu0 %761
  %763 = vrot.lane.b32.xlu0 %v758, 127
  %v764 = vpop.permute.xlu0 %763
  %v765 = vsel %vm641, %v762, %v764
  %v768 = vsel %vm523, %v765, 0.0
  %v769 = vsel %vm524, %v764, 0.0
  %770 = vst [vmem:[#allocation4 + $0xb0] sm:$0xff] %v768
  %771 = vst.msk [vmem:[#allocation4 + $0xb8] sm:$0xff] %vm641, %v769
  %v772 = vld [vmem:[#allocation3 + $0x10] sm:$0xff]
  %v773 = vld [vmem:[#allocation3 + $0x18] sm:$0xff]
  %776 = vrot.lane.b32.xlu0 %v772, 113
  %v777 = vpop.permute.xlu0 %776
  %778 = vrot.lane.b32.xlu0 %v773, 113
  %v779 = vpop.permute.xlu0 %778
  %v780 = vsel %vm657, %v777, %v779
  %v783 = vsel %vm525, %v780, 0.0
  %v784 = vsel %vm526, %v779, 0.0
  %785 = vst [vmem:[#allocation4 + $0xd0] sm:$0xff] %v783
  %786 = vst.msk [vmem:[#allocation4 + $0xd8] sm:$0xff] %vm657, %v784
  %v787 = vld [vmem:[#allocation3 + $0x10] sm:$0xff]
  %v788 = vld [vmem:[#allocation3 + $0x18] sm:$0xff]
  %791 = vrot.lane.b32.xlu0 %v787, 112
  %v792 = vpop.permute.xlu0 %791
  %793 = vrot.lane.b32.xlu0 %v788, 112
  %v794 = vpop.permute.xlu0 %793
  %v795 = vsel %vm673, %v792, %v794
  %798 = vst [vmem:[#allocation4 + $0xf0] sm:$0xff] %v795
  %799 = vst.msk [vmem:[#allocation4 + $0xf8] sm:$0xff] %vm673, %v794
  %v800 = vld [vmem:[#allocation3 + $0x10] sm:$0xff]
  %v801 = vld [vmem:[#allocation3 + $0x18] sm:$0xff]
  %804 = vrot.lane.b32.xlu0 %v800, 111
  %v805 = vpop.permute.xlu0 %804
  %806 = vrot.lane.b32.xlu0 %v801, 111
  %v807 = vpop.permute.xlu0 %806
  %v808 = vsel %vm687, %v805, %v807
  %v811 = vsel %vm523, %v808, 0.0
  %v812 = vsel %vm524, %v807, 0.0
  %813 = vst [vmem:[#allocation4 + $0x110] sm:$0xff] %v811
  %814 = vst.msk [vmem:[#allocation4 + $0x118] sm:$0xff] %vm687, %v812
  %v815 = vld [vmem:[%s5] sm:$0xff]
  %v816 = vld [vmem:[#allocation4] sm:$0xff]
  %v817 = vld [vmem:[#allocation4 + $0x8] sm:$0xff]
  %v818 = vld [vmem:[#allocation4 + $0x10] sm:$0xff]
  %v819 = vld [vmem:[#allocation4 + $0x18] sm:$0xff]
  %v820 = vld [vmem:[#allocation4 + $0x20] sm:$0xff]
  %v821 = vld [vmem:[#allocation4 + $0x28] sm:$0xff]
  %v822 = vld [vmem:[#allocation4 + $0x30] sm:$0xff]
  %v823 = vld [vmem:[#allocation4 + $0x38] sm:$0xff]
  %v824 = vld [vmem:[#allocation4 + $0x40] sm:$0xff]
  %v825 = vld [vmem:[#allocation4 + $0x48] sm:$0xff]
  %v826 = vld [vmem:[#allocation4 + $0x50] sm:$0xff]
  %v827 = vld [vmem:[#allocation4 + $0x58] sm:$0xff]
  %v828 = vld [vmem:[#allocation4 + $0x60] sm:$0xff]
  %v829 = vld [vmem:[#allocation4 + $0x68] sm:$0xff]
  %v830 = vld [vmem:[#allocation4 + $0x70] sm:$0xff]
  %v831 = vld [vmem:[#allocation4 + $0x78] sm:$0xff]
  %v832 = vld [vmem:[#allocation4 + $0x80] sm:$0xff]
  %v833 = vld [vmem:[#allocation4 + $0x88] sm:$0xff]
  %v834 = vld [vmem:[#allocation4 + $0x90] sm:$0xff]
  %v835 = vld [vmem:[#allocation4 + $0x98] sm:$0xff]
  %v836 = vld [vmem:[#allocation4 + $0xa0] sm:$0xff]
  %v837 = vld [vmem:[#allocation4 + $0xa8] sm:$0xff]
  %v838 = vld [vmem:[#allocation4 + $0xb0] sm:$0xff]
  %v839 = vld [vmem:[#allocation4 + $0xb8] sm:$0xff]
  %v840 = vld [vmem:[#allocation4 + $0xc0] sm:$0xff]
  %v841 = vld [vmem:[#allocation4 + $0xc8] sm:$0xff]
  %v842 = vld [vmem:[#allocation4 + $0xd0] sm:$0xff]
  %v843 = vld [vmem:[#allocation4 + $0xd8] sm:$0xff]
  %v844 = vld [vmem:[#allocation4 + $0xe0] sm:$0xff]
  %v845 = vld [vmem:[#allocation4 + $0xe8] sm:$0xff]
  %v846 = vld [vmem:[#allocation4 + $0xf0] sm:$0xff]
  %v847 = vld [vmem:[#allocation4 + $0xf8] sm:$0xff]
  %v848 = vld [vmem:[#allocation4 + $0x100] sm:$0xff]
  %v849 = vld [vmem:[#allocation4 + $0x108] sm:$0xff]
  %v850 = vld [vmem:[#allocation4 + $0x110] sm:$0xff]
  %v851 = vld [vmem:[#allocation4 + $0x118] sm:$0xff]
  %vm852 = vcmask 588800
  %v854 = vsel %vm852, %v815, 0
  %856 = vmatprep.subr.mxu0 %v817
  %857 = vmatpush1.msra.mxu0 %v816
  %858 = vmatprep.subr.mxu0 %v821
  %859 = vmatpush1.msra.mxu0 %v820
  %860 = vmatprep.subr.mxu0 %v825
  %861 = vmatpush1.msra.mxu0 %v824
  %862 = vmatprep.subr.mxu0 %v829
  %863 = vmatpush1.msra.mxu0 %v828
  %864 = vmatprep.subr.mxu0 %v833
  %865 = vmatpush1.msra.mxu0 %v832
  %866 = vmatprep.subr.mxu0 %v837
  %867 = vmatpush1.msra.mxu0 %v836
  %868 = vmatprep.subr.mxu0 %v841
  %869 = vmatpush1.msra.mxu0 %v840
  %870 = vmatprep.subr.mxu0 %v845
  %871 = vmatpush1.msra.mxu0 %v844
  %872 = vmatprep.subr.mxu0 %v849
  %873 = vmatpush1.msra.mxu0 %v848
  %874 = vmatprep.subr.mxu0 0.0
  %875 = vmatpush1.msra.mxu0 0.0
  %876 = vmatprep.subr.mxu0 0.0
  %877 = vmatpush1.msra.mxu0 0.0
  %878 = vmatprep.subr.mxu0 0.0
  %879 = vmatpush1.msra.mxu0 0.0
  %880 = vmatprep.subr.mxu0 0.0
  %881 = vmatpush1.msra.mxu0 0.0
  %882 = vmatprep.subr.mxu0 0.0
  %883 = vmatpush1.msra.mxu0 0.0
  %884 = vmatprep.subr.mxu0 0.0
  %885 = vmatpush1.msra.mxu0 0.0
  %886 = vmatprep.subr.mxu0 0.0
  %887 = vmatpush1.msra.mxu0 0.0
  %888 = vmatprep.subr.mxu0 0.0
  %889 = vmatpush1.msra.mxu0 0.0
  %890 = vmatprep.subr.mxu0 0.0
  %891 = vmatpush1.msra.mxu0 0.0
  %892 = vmatprep.subr.mxu0 0.0
  %893 = vmatpush1.msra.mxu0 0.0
  %894 = vmatprep.subr.mxu0 0.0
  %895 = vmatpush1.msra.mxu0 0.0
  %896 = vmatprep.subr.mxu0 0.0
  %897 = vmatpush1.msra.mxu0 0.0
  %898 = vmatprep.subr.mxu0 0.0
  %899 = vmatpush1.msra.mxu0 0.0
  %900 = vmatprep.subr.mxu0 0.0
  %901 = vmatpush1.msra.mxu0 0.0
  %902 = vmatprep.subr.mxu0 0.0
  %903 = vmatpush1.msra.mxu0 0.0
  %904 = vmatprep.subr.mxu0 0.0
  %905 = vmatpush1.msra.mxu0 0.0
  %906 = vmatprep.subr.mxu0 0.0
  %907 = vmatpush1.msra.mxu0 0.0
  %908 = vmatprep.subr.mxu0 0.0
  %909 = vmatpush1.msra.mxu0 0.0
  %910 = vmatprep.subr.mxu0 0.0
  %911 = vmatpush1.msra.mxu0 0.0
  %912 = vmatprep.subr.mxu0 0.0
  %913 = vmatpush1.msra.mxu0 0.0
  %914 = vmatprep.subr.mxu0 0.0
  %915 = vmatpush1.msra.mxu0 0.0
  %916 = vmatprep.subr.mxu0 0.0
  %917 = vmatpush1.msra.mxu0 0.0
  %918 = vmatprep.subr.mxu0 0.0
  %919 = vmatpush1.msra.mxu0 0.0
  %920 = vmatprep.mubr.f32.mxu0 0.0
  %921 = vmatmul.mubr.f32.gmra.mrb[0].mxu0 %v854
  %v922 = vpop.f32.mrb[0].mxu0
  %v923 = vadd.f32 0.0, %v922
  %v924 = vpop.f32.mrb[0].mxu0
  %v925 = vadd.f32 0.0, %v924
  %926 = vdwg.mxu0
  %927 = vmatprep.subr.mxu0 %v819
  %928 = vmatpush1.msra.mxu0 %v818
  %929 = vmatprep.subr.mxu0 %v823
  %930 = vmatpush1.msra.mxu0 %v822
  %931 = vmatprep.subr.mxu0 %v827
  %932 = vmatpush1.msra.mxu0 %v826
  %933 = vmatprep.subr.mxu0 %v831
  %934 = vmatpush1.msra.mxu0 %v830
  %935 = vmatprep.subr.mxu0 %v835
  %936 = vmatpush1.msra.mxu0 %v834
  %937 = vmatprep.subr.mxu0 %v839
  %938 = vmatpush1.msra.mxu0 %v838
  %939 = vmatprep.subr.mxu0 %v843
  %940 = vmatpush1.msra.mxu0 %v842
  %941 = vmatprep.subr.mxu0 %v847
  %942 = vmatpush1.msra.mxu0 %v846
  %943 = vmatprep.subr.mxu0 %v851
  %944 = vmatpush1.msra.mxu0 %v850
  %945 = vmatprep.subr.mxu0 0.0
  %946 = vmatpush1.msra.mxu0 0.0
  %947 = vmatprep.subr.mxu0 0.0
  %948 = vmatpush1.msra.mxu0 0.0
  %949 = vmatprep.subr.mxu0 0.0
  %950 = vmatpush1.msra.mxu0 0.0
  %951 = vmatprep.subr.mxu0 0.0
  %952 = vmatpush1.msra.mxu0 0.0
  %953 = vmatprep.subr.mxu0 0.0
  %954 = vmatpush1.msra.mxu0 0.0
  %955 = vmatprep.subr.mxu0 0.0
  %956 = vmatpush1.msra.mxu0 0.0
  %957 = vmatprep.subr.mxu0 0.0
  %958 = vmatpush1.msra.mxu0 0.0
  %959 = vmatprep.subr.mxu0 0.0
  %960 = vmatpush1.msra.mxu0 0.0
  %961 = vmatprep.subr.mxu0 0.0
  %962 = vmatpush1.msra.mxu0 0.0
  %963 = vmatprep.subr.mxu0 0.0
  %964 = vmatpush1.msra.mxu0 0.0
  %965 = vmatprep.subr.mxu0 0.0
  %966 = vmatpush1.msra.mxu0 0.0
  %967 = vmatprep.subr.mxu0 0.0
  %968 = vmatpush1.msra.mxu0 0.0
  %969 = vmatprep.subr.mxu0 0.0
  %970 = vmatpush1.msra.mxu0 0.0
  %971 = vmatprep.subr.mxu0 0.0
  %972 = vmatpush1.msra.mxu0 0.0
  %973 = vmatprep.subr.mxu0 0.0
  %974 = vmatpush1.msra.mxu0 0.0
  %975 = vmatprep.subr.mxu0 0.0
  %976 = vmatpush1.msra.mxu0 0.0
  %977 = vmatprep.subr.mxu0 0.0
  %978 = vmatpush1.msra.mxu0 0.0
  %979 = vmatprep.subr.mxu0 0.0
  %980 = vmatpush1.msra.mxu0 0.0
  %981 = vmatprep.subr.mxu0 0.0
  %982 = vmatpush1.msra.mxu0 0.0
  %983 = vmatprep.subr.mxu0 0.0
  %984 = vmatpush1.msra.mxu0 0.0
  %985 = vmatprep.subr.mxu0 0.0
  %986 = vmatpush1.msra.mxu0 0.0
  %987 = vmatprep.subr.mxu0 0.0
  %988 = vmatpush1.msra.mxu0 0.0
  %989 = vmatprep.subr.mxu0 0.0
  %990 = vmatpush1.msra.mxu0 0.0
  %991 = vmatprep.mubr.f32.mxu0 0.0
  %992 = vmatmul.mubr.f32.gmra.mrb[0].mxu0 %v854
  %v993 = vpop.f32.mrb[0].mxu0
  %v994 = vadd.f32 0.0, %v993
  %v995 = vpop.f32.mrb[0].mxu0
  %v996 = vadd.f32 0.0, %v995
  %997 = vdwg.mxu0
  %998 = vst [vmem:[%s6] sm:$0xff] %v923
  %999 = vst [vmem:[%s6 + $0x8] sm:$0xff] %v925
  %s1000 = scalar_lea.vmem %s6, 16
  %1001 = vst [vmem:[%s1000] sm:$0xff] %v994
  %1002 = vst [vmem:[%s1000 + $0x8] sm:$0xff] %v996
  // Predicated region
  $region26: #{prompt_gen_block_v4.1} parent=0 // pred_check
    _
  $region27: #{prompt_gen_block_v4.1} parent=0 // pred_check_branch
    %1004 = sbr.rel (0) target = $region29
  $region28: #{prompt_gen_block_v4.1} parent=0 // pred_region
    _
  $region29: #{prompt_gen_block_v4.1} parent=0 // pred_fallthru
    _
  // Predicated region
  $region30: #{prompt_gen_block_v4.1} parent=0 // pred_check
    _
  $region31: #{prompt_gen_block_v4.1} parent=0 // pred_check_branch
    %1006 = sbr.rel (0) target = $region33
  $region32: #{prompt_gen_block_v4.1} parent=0 // pred_region
    _
  $region33: #{prompt_gen_block_v4.1} parent=0 // pred_fallthru
    _

</llo_original>
